<compile_context>
chip_gen: v7x
topology: tpu7x:2x2x1
jax: 0.10.0
libtpu: 0.0.40
codegen_flags: <defaults>
</compile_context>

<pallas_src>
import functools

import jax
import jax.numpy as jnp
from jax.experimental import pallas as pl
from jax.experimental.pallas import tpu as pltpu

_LANE = 128  # TPU lane width; hidden feature dims are padded to this.

_ACTIVATIONS = {
    "ReLU": lambda x: jnp.maximum(x, 0.0),
    "Tanh": jnp.tanh,
    # torch nn.GELU default = exact erf.  NOTE (v6e/v7x): exact erf is a long
    # EUP sequence and the single EUP slot saturates first for non-ReLU
    # activations at large tiles; use approximate=True if numerics allow.
    "GELU": lambda x: jax.nn.gelu(x, approximate=False),
    "Sigmoid": jax.nn.sigmoid,
    "LeakyReLU": lambda x: jnp.where(x >= 0, x, 0.01 * x),  # default slope 0.01
}


def _round_up(x, m):
    return ((x + m - 1) // m) * m


def _row_align(dtype):
    """Minimum sublane multiple: 8 for 4-byte, 16 for bf16, 32 for 1-byte dtypes."""
    itemsize = jnp.dtype(dtype).itemsize
    return max(8, 32 // itemsize)


def _choose_tile_n(n, requested, row_align, min_steps=4):
    """Pick tile height: row-aligned, divides padded N exactly, and (when N is
    large enough) leaves >= min_steps grid steps so each v7x TensorCore gets
    >= 2 pipelined iterations (prologue/steady/epilogue DMA overlap)."""
    n_aligned = _round_up(max(n, 1), row_align)
    t = max(row_align, min(_round_up(requested, row_align), n_aligned))
    # Shrink until the grid is deep enough for megacore pipelining.
    while t > row_align and n_aligned // t < min_steps:
        t = max(row_align, (t // 2) // row_align * row_align)
    # Prefer a divisor of n_aligned so no ragged tile / wrapper pad is needed.
    while t > row_align and n_aligned % t != 0:
        t -= row_align
    return t, n_aligned


def _mlp_kernel(*refs, num_layers, activation, out_features):
    """refs = (x_ref, w0, b0, w1, b1, ..., w_{L-1}, b_{L-1}, out_ref)."""
    x_ref = refs[0]
    out_ref = refs[-1]
    param_refs = refs[1:-1]
    act = _ACTIVATIONS[activation]

    h = x_ref[...]
    for layer in range(num_layers):
        w = param_refs[2 * layer][...]          # (d_in, d_out_padded)
        b = param_refs[2 * layer + 1][...]      # (1, d_out_padded)
        d_in = w.shape[0]
        if layer == 0 and d_in < 8:
            # Tiny-K first layer: VPU broadcast-FMA (MXU slot is idle anyway).
            hf = h.astype(jnp.float32)
            wf = w.astype(jnp.float32)
            acc = hf[:, 0:1] * wf[0:1, :]
            for k in range(1, d_in):
                acc = acc + hf[:, k:k + 1] * wf[k:k + 1, :]
        else:
            # Native-dtype MXU matmul (single-pass bf16 when params are bf16)
            # with f32 accumulation.
            acc = jnp.dot(h, w, preferred_element_type=jnp.float32)
        acc = acc + b.astype(jnp.float32)

        if layer != num_layers - 1:
            h = act(acc)
            # Cast back to the next layer's weight dtype: keeps every hidden
            # matmul on the single-pass native-dtype MXU path (an f32 matmul
            # is multi-pass emulation on v5e/v6e/v7x).
            h = h.astype(param_refs[2 * (layer + 1)].dtype)
        else:
            h = acc  # no activation after the last Linear

    # Store only the real feature columns (out_ref's last dim == out_features,
    # a full-dim block): no lane-padded HBM writeback, no follow-up XLA slice.
    out_ref[...] = h[:, :out_features].astype(out_ref.dtype)


def _pad_params(params):
    """Zero-pad hidden/output feature dims to a multiple of _LANE.

    Padded weight rows/cols and bias entries are zero, so act(0) values in
    padded activation columns can never contribute to real outputs.
    """
    padded = []
    for idx, (w, b) in enumerate(params):
        d_in, d_out = w.shape
        d_in_p = d_in if idx == 0 else _round_up(d_in, _LANE)
        d_out_p = _round_up(d_out, _LANE)
        wp = jnp.zeros((d_in_p, d_out_p), w.dtype).at[:d_in, :d_out].set(w)
        bp = jnp.zeros((1, d_out_p), b.dtype).at[:, :d_out].set(
            jnp.reshape(b, (1, d_out)))
        padded.append((wp, bp))
    return padded


def mlp_forward(coords, params, activation="ReLU", tile_n=1024):
    """Pallas equivalent of MLP.forward.

    Args:
      coords: (N, in_features) float array.
      params: list of (W, b) with W: (d_in, d_out), b: (1, d_out) — i.e. the
        transpose of torch nn.Linear's weight layout.
    Returns:
      (outputs, coords_grad): outputs is (N, out_features); coords_grad is the
      coords array (JAX arrays are differentiable by construction — there is
      no requires_grad_ to emulate).
    """
    if activation not in _ACTIVATIONS:
        raise ValueError(f"Unsupported activation: {activation}")

    N, D = coords.shape
    num_layers = len(params)
    out_features = params[-1][0].shape[1]

    padded_params = _pad_params(params)

    row_align = _row_align(coords.dtype)  # 8 (f32) / 16 (bf16) sublane minimum
    tile_n, n_pad = _choose_tile_n(N, tile_n, row_align)

    coords_in = coords
    if n_pad != N:
        # Ragged N only: pad rows once; the extra output rows are sliced off.
        coords_in = jnp.zeros((n_pad, D), coords.dtype).at[:N, :].set(coords)

    flat_params = []
    in_specs = [pl.BlockSpec((tile_n, D), lambda i: (i, 0))]
    for (w, b) in padded_params:
        flat_params.extend([w, b])
        # Constant index maps → weights/biases resident in VMEM for the whole
        # grid, never re-DMA'd.
        # TODO(synk): for very large hidden dims, add pipeline_mode=
        # pl.Buffered(1) here and raise vmem_limit_bytes (v7x: 32 MiB scoped).
        in_specs.append(pl.BlockSpec(w.shape, lambda i: (0, 0)))
        in_specs.append(pl.BlockSpec(b.shape, lambda i: (0, 0)))

    # Lane-narrow but full-last-dim output block: HBM writeback is exactly the
    # real (N, out_features) result.
    out_spec = pl.BlockSpec((tile_n, out_features), lambda i: (i, 0))

    kernel = functools.partial(_mlp_kernel, num_layers=num_layers,
                               activation=activation,
                               out_features=out_features)

    outputs = pl.pallas_call(
        kernel,
        out_shape=jax.ShapeDtypeStruct((n_pad, out_features), coords.dtype),
        grid_spec=pltpu.PrefetchScalarGridSpec(
            num_scalar_prefetch=0,
            grid=(n_pad // tile_n,),
            in_specs=in_specs,
            out_specs=out_spec,
        ),
        compiler_params=pltpu.CompilerParams(
            dimension_semantics=("parallel",)),
    )(coords_in, *flat_params)

    if n_pad != N:
        outputs = outputs[:N]

    # torch's clone().detach().requires_grad_(True) has no value-level effect;
    # in JAX we simply return the coords array (differentiable via jax.grad).
    coords_grad = coords
    return outputs, coords_grad


def init_mlp_params(key, in_features, out_features, hidden_features,
                    hidden_layers, bias=True, dtype=jnp.float32):
    """Deterministic init mirroring nn.Linear's U(-1/sqrt(fan_in), 1/sqrt(fan_in))."""
    dims = ([in_features]
            + [hidden_features] * hidden_layers
            + [out_features])
    params = []
    for d_in, d_out in zip(dims[:-1], dims[1:]):
        key, kw, kb = jax.random.split(key, 3)
        bound = 1.0 / jnp.sqrt(jnp.asarray(d_in, dtype))
        w = jax.random.uniform(kw, (d_in, d_out), dtype, -bound, bound)
        if bias:
            b = jax.random.uniform(kb, (1, d_out), dtype, -bound, bound)
        else:
            b = jnp.zeros((1, d_out), dtype)
        params.append((w, b))
    return params


def _reference_forward(coords, params, activation="ReLU"):
    """Pure-JAX reference for correctness checking."""
    act = _ACTIVATIONS[activation]
    h = coords.astype(jnp.float32)
    for i, (w, b) in enumerate(params):
        h = h @ w.astype(jnp.float32) + b.astype(jnp.float32)
        if i != len(params) - 1:
            h = act(h)
    return h.astype(coords.dtype)


if __name__ == "__main__":
    # Shapes consistent with the module: coords are (N, D) points in [-1, 1].
    N = 1024                  # tile_n auto-clamps to 256 → 4 grid steps (v7x: 2/TC)
    in_features = 2
    hidden_features = 32
    hidden_layers = 3
    out_features = 3
    activation = "ReLU"

    key = jax.random.PRNGKey(0)
    key, kc = jax.random.split(key)
    coords = jax.random.uniform(kc, (N, in_features), jnp.float32, -1.0, 1.0)

    params = init_mlp_params(key, in_features, out_features,
                             hidden_features, hidden_layers, bias=True)

    outputs, coords_grad = mlp_forward(coords, params, activation=activation)
    outputs = jax.block_until_ready(outputs)

    ref = _reference_forward(coords, params, activation=activation)
    assert outputs.shape == (N, out_features)
    assert coords_grad.shape == coords.shape
    assert jnp.allclose(outputs, ref, atol=1e-5, rtol=1e-5), "mismatch vs reference"

    print("KERNEL_OK")
</pallas_src>

<mosaic_0001>
module attributes {stable_mosaic.version = 11 : i64} {
  func.func @_mlp_kernel(%arg0: i32, %arg1: memref<256x2xf32, #tpu.memory_space<vmem>>, %arg2: memref<2x128xf32, #tpu.memory_space<vmem>>, %arg3: memref<1x128xf32, #tpu.memory_space<vmem>>, %arg4: memref<128x128xf32, #tpu.memory_space<vmem>>, %arg5: memref<1x128xf32, #tpu.memory_space<vmem>>, %arg6: memref<128x128xf32, #tpu.memory_space<vmem>>, %arg7: memref<1x128xf32, #tpu.memory_space<vmem>>, %arg8: memref<128x128xf32, #tpu.memory_space<vmem>>, %arg9: memref<1x128xf32, #tpu.memory_space<vmem>>, %arg10: memref<256x3xf32, #tpu.memory_space<vmem>>) attributes {dimension_semantics = [#tpu.dimension_semantics<parallel>], iteration_bounds = array<i64: 4>, scalar_prefetch = 0 : i64, scratch_operands = 0 : i64, tpu.core_type = #tpu.core_type<tc>, window_params = [{transform_indices = @transform_0, window_bounds = array<i64: 256, 2>}, {pipeline_mode = #tpu.pipeline_mode<synchronous>, transform_indices = @transform_1, window_bounds = array<i64: 2, 128>}, {pipeline_mode = #tpu.pipeline_mode<synchronous>, transform_indices = @transform_2, window_bounds = array<i64: 1, 128>}, {pipeline_mode = #tpu.pipeline_mode<synchronous>, transform_indices = @transform_3, window_bounds = array<i64: 128, 128>}, {pipeline_mode = #tpu.pipeline_mode<synchronous>, transform_indices = @transform_4, window_bounds = array<i64: 1, 128>}, {pipeline_mode = #tpu.pipeline_mode<synchronous>, transform_indices = @transform_5, window_bounds = array<i64: 128, 128>}, {pipeline_mode = #tpu.pipeline_mode<synchronous>, transform_indices = @transform_6, window_bounds = array<i64: 1, 128>}, {pipeline_mode = #tpu.pipeline_mode<synchronous>, transform_indices = @transform_7, window_bounds = array<i64: 128, 128>}, {pipeline_mode = #tpu.pipeline_mode<synchronous>, transform_indices = @transform_8, window_bounds = array<i64: 1, 128>}, {transform_indices = @transform_9, window_bounds = array<i64: 256, 3>}]} {
    %c0 = arith.constant 0 : index
    %c0_0 = arith.constant 0 : index
    %0 = vector.load %arg1[%c0, %c0_0] : memref<256x2xf32, #tpu.memory_space<vmem>>, vector<256x2xf32>
    %c0_1 = arith.constant 0 : index
    %c0_2 = arith.constant 0 : index
    %1 = vector.load %arg2[%c0_1, %c0_2] : memref<2x128xf32, #tpu.memory_space<vmem>>, vector<2x128xf32>
    %c0_3 = arith.constant 0 : index
    %c0_4 = arith.constant 0 : index
    %2 = vector.load %arg3[%c0_3, %c0_4] : memref<1x128xf32, #tpu.memory_space<vmem>>, vector<1x128xf32>
    %3 = vector.extract_strided_slice %0 {offsets = [0, 0], sizes = [256, 1], strides = [1, 1]} : vector<256x2xf32> to vector<256x1xf32>
    %4 = vector.extract_strided_slice %1 {offsets = [0, 0], sizes = [1, 128], strides = [1, 1]} : vector<2x128xf32> to vector<1x128xf32>
    %5 = vector.broadcast %3 : vector<256x1xf32> to vector<256x128xf32>
    %6 = vector.broadcast %4 : vector<1x128xf32> to vector<256x128xf32>
    %7 = arith.mulf %5, %6 : vector<256x128xf32>
    %8 = vector.extract_strided_slice %0 {offsets = [0, 1], sizes = [256, 1], strides = [1, 1]} : vector<256x2xf32> to vector<256x1xf32>
    %9 = vector.extract_strided_slice %1 {offsets = [1, 0], sizes = [1, 128], strides = [1, 1]} : vector<2x128xf32> to vector<1x128xf32>
    %10 = vector.broadcast %8 : vector<256x1xf32> to vector<256x128xf32>
    %11 = vector.broadcast %9 : vector<1x128xf32> to vector<256x128xf32>
    %12 = arith.mulf %10, %11 : vector<256x128xf32>
    %13 = arith.addf %7, %12 : vector<256x128xf32>
    %14 = vector.broadcast %2 : vector<1x128xf32> to vector<256x128xf32>
    %15 = arith.addf %13, %14 : vector<256x128xf32>
    %cst = arith.constant 0.000000e+00 : f32
    %16 = vector.broadcast %cst : f32 to vector<256x128xf32>
    %17 = arith.maximumf %15, %16 : vector<256x128xf32>
    %c0_5 = arith.constant 0 : index
    %c0_6 = arith.constant 0 : index
    %18 = vector.load %arg4[%c0_5, %c0_6] : memref<128x128xf32, #tpu.memory_space<vmem>>, vector<128x128xf32>
    %c0_7 = arith.constant 0 : index
    %c0_8 = arith.constant 0 : index
    %19 = vector.load %arg5[%c0_7, %c0_8] : memref<1x128xf32, #tpu.memory_space<vmem>>, vector<1x128xf32>
    %cst_9 = arith.constant dense<0.000000e+00> : vector<256x128xf32>
    %20 = tpu.matmul %17, %18, %cst_9 {dimension_numbers = #tpu.dot_dimension_numbers<[1], [0], [0], [1], [0, 0, 1, 1], [], []>} : vector<256x128xf32>, vector<128x128xf32>, vector<256x128xf32> -> vector<256x128xf32>
    %21 = vector.broadcast %19 : vector<1x128xf32> to vector<256x128xf32>
    %22 = arith.addf %20, %21 : vector<256x128xf32>
    %cst_10 = arith.constant 0.000000e+00 : f32
    %23 = vector.broadcast %cst_10 : f32 to vector<256x128xf32>
    %24 = arith.maximumf %22, %23 : vector<256x128xf32>
    %c0_11 = arith.constant 0 : index
    %c0_12 = arith.constant 0 : index
    %25 = vector.load %arg6[%c0_11, %c0_12] : memref<128x128xf32, #tpu.memory_space<vmem>>, vector<128x128xf32>
    %c0_13 = arith.constant 0 : index
    %c0_14 = arith.constant 0 : index
    %26 = vector.load %arg7[%c0_13, %c0_14] : memref<1x128xf32, #tpu.memory_space<vmem>>, vector<1x128xf32>
    %cst_15 = arith.constant dense<0.000000e+00> : vector<256x128xf32>
    %27 = tpu.matmul %24, %25, %cst_15 {dimension_numbers = #tpu.dot_dimension_numbers<[1], [0], [0], [1], [0, 0, 1, 1], [], []>} : vector<256x128xf32>, vector<128x128xf32>, vector<256x128xf32> -> vector<256x128xf32>
    %28 = vector.broadcast %26 : vector<1x128xf32> to vector<256x128xf32>
    %29 = arith.addf %27, %28 : vector<256x128xf32>
    %cst_16 = arith.constant 0.000000e+00 : f32
    %30 = vector.broadcast %cst_16 : f32 to vector<256x128xf32>
    %31 = arith.maximumf %29, %30 : vector<256x128xf32>
    %c0_17 = arith.constant 0 : index
    %c0_18 = arith.constant 0 : index
    %32 = vector.load %arg8[%c0_17, %c0_18] : memref<128x128xf32, #tpu.memory_space<vmem>>, vector<128x128xf32>
    %c0_19 = arith.constant 0 : index
    %c0_20 = arith.constant 0 : index
    %33 = vector.load %arg9[%c0_19, %c0_20] : memref<1x128xf32, #tpu.memory_space<vmem>>, vector<1x128xf32>
    %cst_21 = arith.constant dense<0.000000e+00> : vector<256x128xf32>
    %34 = tpu.matmul %31, %32, %cst_21 {dimension_numbers = #tpu.dot_dimension_numbers<[1], [0], [0], [1], [0, 0, 1, 1], [], []>} : vector<256x128xf32>, vector<128x128xf32>, vector<256x128xf32> -> vector<256x128xf32>
    %35 = vector.broadcast %33 : vector<1x128xf32> to vector<256x128xf32>
    %36 = arith.addf %34, %35 : vector<256x128xf32>
    %37 = vector.extract_strided_slice %36 {offsets = [0, 0], sizes = [256, 3], strides = [1, 1]} : vector<256x128xf32> to vector<256x3xf32>
    %c0_22 = arith.constant 0 : index
    %c0_23 = arith.constant 0 : index
    %38 = vector.load %arg10[%c0_22, %c0_23] : memref<256x3xf32, #tpu.memory_space<vmem>>, vector<256x3xf32>
    tpu.vector_store %arg10[%c0_22, %c0_23], %37 {strides = array<i32>} : memref<256x3xf32, #tpu.memory_space<vmem>>, vector<256x3xf32>,
    return
  }
  func.func @transform_0(%arg0: i32) -> (i32, i32) {
    %c0_i32 = arith.constant 0 : i32
    %c0_i32_0 = arith.constant 0 : i32
    return %arg0, %c0_i32 : i32, i32
  }
  func.func @transform_1(%arg0: i32) -> (i32, i32) {
    %c0_i32 = arith.constant 0 : i32
    %c0_i32_0 = arith.constant 0 : i32
    %c0_i32_1 = arith.constant 0 : i32
    return %c0_i32, %c0_i32_0 : i32, i32
  }
  func.func @transform_2(%arg0: i32) -> (i32, i32) {
    %c0_i32 = arith.constant 0 : i32
    %c0_i32_0 = arith.constant 0 : i32
    %c0_i32_1 = arith.constant 0 : i32
    return %c0_i32, %c0_i32_0 : i32, i32
  }
  func.func @transform_3(%arg0: i32) -> (i32, i32) {
    %c0_i32 = arith.constant 0 : i32
    %c0_i32_0 = arith.constant 0 : i32
    %c0_i32_1 = arith.constant 0 : i32
    return %c0_i32, %c0_i32_0 : i32, i32
  }
  func.func @transform_4(%arg0: i32) -> (i32, i32) {
    %c0_i32 = arith.constant 0 : i32
    %c0_i32_0 = arith.constant 0 : i32
    %c0_i32_1 = arith.constant 0 : i32
    return %c0_i32, %c0_i32_0 : i32, i32
  }
  func.func @transform_5(%arg0: i32) -> (i32, i32) {
    %c0_i32 = arith.constant 0 : i32
    %c0_i32_0 = arith.constant 0 : i32
    %c0_i32_1 = arith.constant 0 : i32
    return %c0_i32, %c0_i32_0 : i32, i32
  }
  func.func @transform_6(%arg0: i32) -> (i32, i32) {
    %c0_i32 = arith.constant 0 : i32
    %c0_i32_0 = arith.constant 0 : i32
    %c0_i32_1 = arith.constant 0 : i32
    return %c0_i32, %c0_i32_0 : i32, i32
  }
  func.func @transform_7(%arg0: i32) -> (i32, i32) {
    %c0_i32 = arith.constant 0 : i32
    %c0_i32_0 = arith.constant 0 : i32
    %c0_i32_1 = arith.constant 0 : i32
    return %c0_i32, %c0_i32_0 : i32, i32
  }
  func.func @transform_8(%arg0: i32) -> (i32, i32) {
    %c0_i32 = arith.constant 0 : i32
    %c0_i32_0 = arith.constant 0 : i32
    %c0_i32_1 = arith.constant 0 : i32
    return %c0_i32, %c0_i32_0 : i32, i32
  }
  func.func @transform_9(%arg0: i32) -> (i32, i32) {
    %c0_i32 = arith.constant 0 : i32
    %c0_i32_0 = arith.constant 0 : i32
    return %arg0, %c0_i32 : i32, i32
  }
}

</mosaic_0001>

<llo_original>
// kernel: tpu_custom_call.1
$region0: #{tpu_custom_call.1}
  #allocation0 [shape = 'u32[]', space=smem, size = 0x4, offset = 0x4, fixed_abs, tag = 'smem constant byte address 0x4 - core index']
  #allocation1 [shape = 'u32[144,128]{1,0:T(1,128)}', space=vmem, size = 0x12000, scoped, tag = 'internal scratch']
  %s0 = inlined_call_operand.vmem [shape: f32[1024,2], index: 0, kind: input, shape index: {}]
  %s1 = inlined_call_operand.vmem [shape: f32[2,128], index: 1, kind: input, shape index: {}]
  %s2 = inlined_call_operand.vmem [shape: f32[1,128], index: 2, kind: input, shape index: {}]
  %s3 = inlined_call_operand.vmem [shape: f32[128,128], index: 3, kind: input, shape index: {}]
  %s4 = inlined_call_operand.vmem [shape: f32[1,128], index: 4, kind: input, shape index: {}]
  %s5 = inlined_call_operand.vmem [shape: f32[128,128], index: 5, kind: input, shape index: {}]
  %s6 = inlined_call_operand.vmem [shape: f32[1,128], index: 6, kind: input, shape index: {}]
  %s7 = inlined_call_operand.vmem [shape: f32[128,128], index: 7, kind: input, shape index: {}]
  %s8 = inlined_call_operand.vmem [shape: f32[1,128], index: 8, kind: input, shape index: {}]
  %s9 = inlined_call_operand.vmem [shape: f32[1024,3], index: 9, kind: output, shape index: {}]
  %s10 = sld [smem:[#allocation0]]
  $region69: #{tpu_custom_call.1} parent=0
    _
  %s12 = ssub.s32 1, %s10
  %s13 = scalar_select 0, %s12, %s10
  loop: start=0, step=1, limit=6
  $region2: #{tpu_custom_call.1} parent=0 // loop_pre_header
    _
  $region3: #{tpu_custom_call.1} parent=0 // loop_header
    %s15 = sphi 0, %s19
    %p16 = scmp.ge.s32.totalorder %s15, 6
    %s25 = sphi 0, %s27
    %s28 = sphi 0, %s25
    %s29 = sphi 0, %s28
    %s45 = sphi 0, %s29
    %s49 = sphi 0, %s49
    %s51 = sphi 0, %s49
    %s52 = sphi 0, %s51
    %s66 = sphi 0, %s52
    %s70 = sphi 0, %s70
    %s72 = sphi 0, %s70
    %s73 = sphi 0, %s72
    %s87 = sphi 0, %s73
    %s91 = sphi 0, %s91
    %s93 = sphi 0, %s91
    %s94 = sphi 0, %s93
    %s108 = sphi 0, %s94
    %s112 = sphi 0, %s112
    %s114 = sphi 0, %s112
    %s115 = sphi 0, %s114
    %s129 = sphi 0, %s115
    %s133 = sphi 0, %s133
    %s135 = sphi 0, %s133
    %s136 = sphi 0, %s135
    %s150 = sphi 0, %s136
    %s154 = sphi 0, %s154
    %s156 = sphi 0, %s154
    %s157 = sphi 0, %s156
    %s171 = sphi 0, %s157
    %s175 = sphi 0, %s175
    %s177 = sphi 0, %s175
    %s178 = sphi 0, %s177
    %s192 = sphi 0, %s178
    %s196 = sphi 0, %s196
    %s198 = sphi 0, %s196
    %s199 = sphi 0, %s198
    %s213 = sphi 0, %s199
    %s219 = sphi 0, %s221
    %s222 = sphi 0, %s219
    %s223 = sphi 0, %s222
    %s239 = sphi 0, %s223
  $region4: #{tpu_custom_call.1} parent=0 // loop_header_branch
    %18 = sbr.rel (%p16) target = $region8
  $region5: #{tpu_custom_call.1} parent=0 // loop_body
    %s20 = ssub.s32 %s15, 1
    %s21 = ssub.s32 %s15, 2
    %s22 = sadd.s32 %s15, 1
    %s23 = ssub.s32 %s15, %s22
    %p24 = scmp.eq.s32.totalorder %s23, 0
    %s26 = sadd.s32 %s25, 1
    %s27 = scalar_select %p24, %s25, %s26
    %p30 = pneg %p24
    %p31 = scmp.eq.s32.totalorder %s15, 3
    %p32 = por %p30, %p31
    %p33 = scmp.ne.s32.totalorder %s25, %s28
    %p34 = scmp.eq.s32.totalorder %s15, 0
    %p35 = por %p33, %p34
    %p36 = scmp.ne.s32.totalorder %s25, %s28
    %p37 = scmp.eq.s32.totalorder %s20, 3
    %p38 = por %p36, %p37
    %p39 = scmp.ne.s32.totalorder %s28, %s29
    %p40 = scmp.eq.s32.totalorder %s20, 0
    %p41 = por %p39, %p40
    %p42 = scmp.ne.s32.totalorder %s28, %s29
    %p43 = scmp.eq.s32.totalorder %s21, 3
    %p44 = por %p42, %p43
    %p46 = scmp.ne.s32.totalorder %s29, %s45
    %p47 = scmp.eq.s32.totalorder %s21, 0
    %p48 = por %p46, %p47
    %s50 = sadd.s32 %s49, 1
    %p53 = scmp.eq.s32.totalorder %s15, 3
    %p54 = scmp.ne.s32.totalorder %s49, %s51
    %p55 = scmp.eq.s32.totalorder %s15, 0
    %p56 = por %p54, %p55
    %p57 = scmp.ne.s32.totalorder %s49, %s51
    %p58 = scmp.eq.s32.totalorder %s20, 3
    %p59 = por %p57, %p58
    %p60 = scmp.ne.s32.totalorder %s51, %s52
    %p61 = scmp.eq.s32.totalorder %s20, 0
    %p62 = por %p60, %p61
    %p63 = scmp.ne.s32.totalorder %s51, %s52
    %p64 = scmp.eq.s32.totalorder %s21, 3
    %p65 = por %p63, %p64
    %p67 = scmp.ne.s32.totalorder %s52, %s66
    %p68 = scmp.eq.s32.totalorder %s21, 0
    %p69 = por %p67, %p68
    %s71 = sadd.s32 %s70, 1
    %p74 = scmp.eq.s32.totalorder %s15, 3
    %p75 = scmp.ne.s32.totalorder %s70, %s72
    %p76 = scmp.eq.s32.totalorder %s15, 0
    %p77 = por %p75, %p76
    %p78 = scmp.ne.s32.totalorder %s70, %s72
    %p79 = scmp.eq.s32.totalorder %s20, 3
    %p80 = por %p78, %p79
    %p81 = scmp.ne.s32.totalorder %s72, %s73
    %p82 = scmp.eq.s32.totalorder %s20, 0
    %p83 = por %p81, %p82
    %p84 = scmp.ne.s32.totalorder %s72, %s73
    %p85 = scmp.eq.s32.totalorder %s21, 3
    %p86 = por %p84, %p85
    %p88 = scmp.ne.s32.totalorder %s73, %s87
    %p89 = scmp.eq.s32.totalorder %s21, 0
    %p90 = por %p88, %p89
    %s92 = sadd.s32 %s91, 1
    %p95 = scmp.eq.s32.totalorder %s15, 3
    %p96 = scmp.ne.s32.totalorder %s91, %s93
    %p97 = scmp.eq.s32.totalorder %s15, 0
    %p98 = por %p96, %p97
    %p99 = scmp.ne.s32.totalorder %s91, %s93
    %p100 = scmp.eq.s32.totalorder %s20, 3
    %p101 = por %p99, %p100
    %p102 = scmp.ne.s32.totalorder %s93, %s94
    %p103 = scmp.eq.s32.totalorder %s20, 0
    %p104 = por %p102, %p103
    %p105 = scmp.ne.s32.totalorder %s93, %s94
    %p106 = scmp.eq.s32.totalorder %s21, 3
    %p107 = por %p105, %p106
    %p109 = scmp.ne.s32.totalorder %s94, %s108
    %p110 = scmp.eq.s32.totalorder %s21, 0
    %p111 = por %p109, %p110
    %s113 = sadd.s32 %s112, 1
    %p116 = scmp.eq.s32.totalorder %s15, 3
    %p117 = scmp.ne.s32.totalorder %s112, %s114
    %p118 = scmp.eq.s32.totalorder %s15, 0
    %p119 = por %p117, %p118
    %p120 = scmp.ne.s32.totalorder %s112, %s114
    %p121 = scmp.eq.s32.totalorder %s20, 3
    %p122 = por %p120, %p121
    %p123 = scmp.ne.s32.totalorder %s114, %s115
    %p124 = scmp.eq.s32.totalorder %s20, 0
    %p125 = por %p123, %p124
    %p126 = scmp.ne.s32.totalorder %s114, %s115
    %p127 = scmp.eq.s32.totalorder %s21, 3
    %p128 = por %p126, %p127
    %p130 = scmp.ne.s32.totalorder %s115, %s129
    %p131 = scmp.eq.s32.totalorder %s21, 0
    %p132 = por %p130, %p131
    %s134 = sadd.s32 %s133, 1
    %p137 = scmp.eq.s32.totalorder %s15, 3
    %p138 = scmp.ne.s32.totalorder %s133, %s135
    %p139 = scmp.eq.s32.totalorder %s15, 0
    %p140 = por %p138, %p139
    %p141 = scmp.ne.s32.totalorder %s133, %s135
    %p142 = scmp.eq.s32.totalorder %s20, 3
    %p143 = por %p141, %p142
    %p144 = scmp.ne.s32.totalorder %s135, %s136
    %p145 = scmp.eq.s32.totalorder %s20, 0
    %p146 = por %p144, %p145
    %p147 = scmp.ne.s32.totalorder %s135, %s136
    %p148 = scmp.eq.s32.totalorder %s21, 3
    %p149 = por %p147, %p148
    %p151 = scmp.ne.s32.totalorder %s136, %s150
    %p152 = scmp.eq.s32.totalorder %s21, 0
    %p153 = por %p151, %p152
    %s155 = sadd.s32 %s154, 1
    %p158 = scmp.eq.s32.totalorder %s15, 3
    %p159 = scmp.ne.s32.totalorder %s154, %s156
    %p160 = scmp.eq.s32.totalorder %s15, 0
    %p161 = por %p159, %p160
    %p162 = scmp.ne.s32.totalorder %s154, %s156
    %p163 = scmp.eq.s32.totalorder %s20, 3
    %p164 = por %p162, %p163
    %p165 = scmp.ne.s32.totalorder %s156, %s157
    %p166 = scmp.eq.s32.totalorder %s20, 0
    %p167 = por %p165, %p166
    %p168 = scmp.ne.s32.totalorder %s156, %s157
    %p169 = scmp.eq.s32.totalorder %s21, 3
    %p170 = por %p168, %p169
    %p172 = scmp.ne.s32.totalorder %s157, %s171
    %p173 = scmp.eq.s32.totalorder %s21, 0
    %p174 = por %p172, %p173
    %s176 = sadd.s32 %s175, 1
    %p179 = scmp.eq.s32.totalorder %s15, 3
    %p180 = scmp.ne.s32.totalorder %s175, %s177
    %p181 = scmp.eq.s32.totalorder %s15, 0
    %p182 = por %p180, %p181
    %p183 = scmp.ne.s32.totalorder %s175, %s177
    %p184 = scmp.eq.s32.totalorder %s20, 3
    %p185 = por %p183, %p184
    %p186 = scmp.ne.s32.totalorder %s177, %s178
    %p187 = scmp.eq.s32.totalorder %s20, 0
    %p188 = por %p186, %p187
    %p189 = scmp.ne.s32.totalorder %s177, %s178
    %p190 = scmp.eq.s32.totalorder %s21, 3
    %p191 = por %p189, %p190
    %p193 = scmp.ne.s32.totalorder %s178, %s192
    %p194 = scmp.eq.s32.totalorder %s21, 0
    %p195 = por %p193, %p194
    %s197 = sadd.s32 %s196, 1
    %p200 = scmp.eq.s32.totalorder %s15, 3
    %p201 = scmp.ne.s32.totalorder %s196, %s198
    %p202 = scmp.eq.s32.totalorder %s15, 0
    %p203 = por %p201, %p202
    %p204 = scmp.ne.s32.totalorder %s196, %s198
    %p205 = scmp.eq.s32.totalorder %s20, 3
    %p206 = por %p204, %p205
    %p207 = scmp.ne.s32.totalorder %s198, %s199
    %p208 = scmp.eq.s32.totalorder %s20, 0
    %p209 = por %p207, %p208
    %p210 = scmp.ne.s32.totalorder %s198, %s199
    %p211 = scmp.eq.s32.totalorder %s21, 3
    %p212 = por %p210, %p211
    %p214 = scmp.ne.s32.totalorder %s199, %s213
    %p215 = scmp.eq.s32.totalorder %s21, 0
    %p216 = por %p214, %p215
    %s217 = ssub.s32 %s15, %s22
    %p218 = scmp.eq.s32.totalorder %s217, 0
    %s220 = sadd.s32 %s219, 1
    %s221 = scalar_select %p218, %s219, %s220
    %p224 = pneg %p218
    %p225 = scmp.eq.s32.totalorder %s15, 3
    %p226 = por %p224, %p225
    %p227 = scmp.ne.s32.totalorder %s219, %s222
    %p228 = scmp.eq.s32.totalorder %s15, 0
    %p229 = por %p227, %p228
    %p230 = scmp.ne.s32.totalorder %s219, %s222
    %p231 = scmp.eq.s32.totalorder %s20, 3
    %p232 = por %p230, %p231
    %p233 = scmp.ne.s32.totalorder %s222, %s223
    %p234 = scmp.eq.s32.totalorder %s20, 0
    %p235 = por %p233, %p234
    %p236 = scmp.ne.s32.totalorder %s222, %s223
    %p237 = scmp.eq.s32.totalorder %s21, 3
    %p238 = por %p236, %p237
    %p240 = scmp.ne.s32.totalorder %s223, %s239
    %p241 = scmp.eq.s32.totalorder %s21, 0
    %p242 = por %p240, %p241
    %p243 = scmp.le.s32.totalorder 1, %s15
    %p244 = scmp.lt.s32.totalorder %s15, 5
    %p245 = pnand %p243, %p244
    %p246 = pneg %p245
    // Predicated region
    $region9: #{tpu_custom_call.1} parent=5 // pred_check
      _
    $region10: #{tpu_custom_call.1} parent=5 // pred_check_branch
      %248 = sbr.rel (%p245) target = $region12
    $region11: #{tpu_custom_call.1} parent=5 // pred_region
      %s249 = ssub.s32 %s15, 1
      // Predicated region
      $region13: #{tpu_custom_call.1} parent=11 // pred_check
        %p250 = pneg %p62
      $region14: #{tpu_custom_call.1} parent=11 // pred_check_branch
        %252 = sbr.rel (%p250) target = $region16
      $region15: #{tpu_custom_call.1} parent=11 // pred_region
        _
      $region16: #{tpu_custom_call.1} parent=11 // pred_fallthru
        _
      // Predicated region
      $region17: #{tpu_custom_call.1} parent=11 // pred_check
        %p253 = pneg %p83
      $region18: #{tpu_custom_call.1} parent=11 // pred_check_branch
        %255 = sbr.rel (%p253) target = $region20
      $region19: #{tpu_custom_call.1} parent=11 // pred_region
        _
      $region20: #{tpu_custom_call.1} parent=11 // pred_fallthru
        _
      // Predicated region
      $region21: #{tpu_custom_call.1} parent=11 // pred_check
        %p256 = pneg %p104
      $region22: #{tpu_custom_call.1} parent=11 // pred_check_branch
        %258 = sbr.rel (%p256) target = $region24
      $region23: #{tpu_custom_call.1} parent=11 // pred_region
        _
      $region24: #{tpu_custom_call.1} parent=11 // pred_fallthru
        _
      // Predicated region
      $region25: #{tpu_custom_call.1} parent=11 // pred_check
        %p259 = pneg %p125
      $region26: #{tpu_custom_call.1} parent=11 // pred_check_branch
        %261 = sbr.rel (%p259) target = $region28
      $region27: #{tpu_custom_call.1} parent=11 // pred_region
        _
      $region28: #{tpu_custom_call.1} parent=11 // pred_fallthru
        _
      // Predicated region
      $region29: #{tpu_custom_call.1} parent=11 // pred_check
        %p262 = pneg %p146
      $region30: #{tpu_custom_call.1} parent=11 // pred_check_branch
        %264 = sbr.rel (%p262) target = $region32
      $region31: #{tpu_custom_call.1} parent=11 // pred_region
        _
      $region32: #{tpu_custom_call.1} parent=11 // pred_fallthru
        _
      // Predicated region
      $region33: #{tpu_custom_call.1} parent=11 // pred_check
        %p265 = pneg %p167
      $region34: #{tpu_custom_call.1} parent=11 // pred_check_branch
        %267 = sbr.rel (%p265) target = $region36
      $region35: #{tpu_custom_call.1} parent=11 // pred_region
        _
      $region36: #{tpu_custom_call.1} parent=11 // pred_fallthru
        _
      // Predicated region
      $region37: #{tpu_custom_call.1} parent=11 // pred_check
        %p268 = pneg %p188
      $region38: #{tpu_custom_call.1} parent=11 // pred_check_branch
        %270 = sbr.rel (%p268) target = $region40
      $region39: #{tpu_custom_call.1} parent=11 // pred_region
        _
      $region40: #{tpu_custom_call.1} parent=11 // pred_fallthru
        _
      // Predicated region
      $region41: #{tpu_custom_call.1} parent=11 // pred_check
        %p271 = pneg %p209
      $region42: #{tpu_custom_call.1} parent=11 // pred_check_branch
        %273 = sbr.rel (%p271) target = $region44
      $region43: #{tpu_custom_call.1} parent=11 // pred_region
        _
      $region44: #{tpu_custom_call.1} parent=11 // pred_fallthru
        _
    $region12: #{tpu_custom_call.1} parent=5 // pred_fallthru
      _
    %p274 = scmp.lt.s32.totalorder %s15, 4
    // Predicated region
    $region45: #{tpu_custom_call.1} parent=5 // pred_check
      %p275 = pneg %p274
    $region46: #{tpu_custom_call.1} parent=5 // pred_check_branch
      %277 = sbr.rel (%p275) target = $region48
    $region47: #{tpu_custom_call.1} parent=5 // pred_region
      // Predicated region
      $region49: #{tpu_custom_call.1} parent=47 // pred_check
        %p278 = pneg %p35
      $region50: #{tpu_custom_call.1} parent=47 // pred_check_branch
        %280 = sbr.rel (%p278) target = $region52
      $region51: #{tpu_custom_call.1} parent=47 // pred_region
        %s281 = smul.u32 32, %s15
        %p282 = scmp.lt.s32.totalorder %s281, 127
        %s283 = scalar_select %p282, %s281, 127
        %s284 = smul.addr %s283, 8
        %s285 = scalar_lea.vmem %s0, %s284
        %s286 = smul.u32 32, %s15
      $region52: #{tpu_custom_call.1} parent=47 // pred_fallthru
        _
    $region48: #{tpu_custom_call.1} parent=5 // pred_fallthru
      _
    %p287 = scmp.le.s32.totalorder 1, %s15
    %p288 = scmp.lt.s32.totalorder %s15, 5
    %p289 = pnand %p287, %p288
    %p290 = pneg %p289
    // Predicated region
    $region53: #{tpu_custom_call.1} parent=5 // pred_check
      _
    $region54: #{tpu_custom_call.1} parent=5 // pred_check_branch
      %292 = sbr.rel (%p289) target = $region56
    $region55: #{tpu_custom_call.1} parent=5 // pred_region
      %s293 = ssub.s32 %s15, 1
      %s294 = smul.u32 32, %s20
      %p295 = scmp.lt.s32.totalorder %s294, 127
      %s296 = scalar_select %p295, %s294, 127
      %s297 = smul.addr %s296, 8
      %s298 = scalar_lea.vmem %s0, %s297
      %p299 = pneg %p41
      %p300 = pneg %p38
      %p301 = pneg %p62
      %p302 = pneg %p59
      %p303 = pneg %p83
      %p304 = pneg %p80
      %p305 = pneg %p104
      %p306 = pneg %p101
      %p307 = pneg %p125
      %p308 = pneg %p122
      %p309 = pneg %p146
      %p310 = pneg %p143
      %p311 = pneg %p167
      %p312 = pneg %p164
      %p313 = pneg %p188
      %p314 = pneg %p185
      %p315 = pneg %p209
      %p316 = pneg %p206
      %p317 = pneg %p235
      %p318 = pneg %p232
      %s319 = smul.u32 32, %s20
      %p320 = scmp.lt.s32.totalorder %s319, 127
      %s321 = scalar_select %p320, %s319, 127
      %s322 = smul.addr %s321, 8
      %s323 = scalar_lea.vmem %s9, %s322
      %s324 = smul.u32 32, %s20
      %p325 = scmp.lt.s32.totalorder %s324, 127
      %s326 = scalar_select %p325, %s324, 127
      %s327 = smul.addr %s326, 8
      %s328 = scalar_lea.vmem %s0, %s327
      %s329 = smul.u32 32, %s20
      %s330 = smul.u32 32, %s20
      %p331 = scmp.lt.s32.totalorder %s330, 127
      %s332 = scalar_select %p331, %s330, 127
      %s333 = smul.addr %s332, 8
      %s334 = scalar_lea.vmem %s9, %s333
      %s335 = smul.u32 32, %s20
      %v336 = vld [vmem:[%s328] sm:$0xff]
      %v337 = vld [vmem:[%s328 + $0x8] sm:$0xff]
      %v338 = vld [vmem:[%s328 + $0x10] sm:$0xff]
      %v339 = vld [vmem:[%s328 + $0x18] sm:$0xff]
      %v340 = vld [vmem:[%s328 + $0x20] sm:$0xff]
      %v341 = vld [vmem:[%s328 + $0x28] sm:$0xff]
      %v342 = vld [vmem:[%s328 + $0x30] sm:$0xff]
      %v343 = vld [vmem:[%s328 + $0x38] sm:$0xff]
      %v344 = vld [vmem:[%s328 + $0x40] sm:$0xff]
      %v345 = vld [vmem:[%s328 + $0x48] sm:$0xff]
      %v346 = vld [vmem:[%s328 + $0x50] sm:$0xff]
      %v347 = vld [vmem:[%s328 + $0x58] sm:$0xff]
      %v348 = vld [vmem:[%s328 + $0x60] sm:$0xff]
      %v349 = vld [vmem:[%s328 + $0x68] sm:$0xff]
      %v350 = vld [vmem:[%s328 + $0x70] sm:$0xff]
      %v351 = vld [vmem:[%s328 + $0x78] sm:$0xff]
      %v352 = vld [vmem:[%s328 + $0x80] sm:$0xff]
      %v353 = vld [vmem:[%s328 + $0x88] sm:$0xff]
      %v354 = vld [vmem:[%s328 + $0x90] sm:$0xff]
      %v355 = vld [vmem:[%s328 + $0x98] sm:$0xff]
      %v356 = vld [vmem:[%s328 + $0xa0] sm:$0xff]
      %v357 = vld [vmem:[%s328 + $0xa8] sm:$0xff]
      %v358 = vld [vmem:[%s328 + $0xb0] sm:$0xff]
      %v359 = vld [vmem:[%s328 + $0xb8] sm:$0xff]
      %v360 = vld [vmem:[%s328 + $0xc0] sm:$0xff]
      %v361 = vld [vmem:[%s328 + $0xc8] sm:$0xff]
      %v362 = vld [vmem:[%s328 + $0xd0] sm:$0xff]
      %v363 = vld [vmem:[%s328 + $0xd8] sm:$0xff]
      %v364 = vld [vmem:[%s328 + $0xe0] sm:$0xff]
      %v365 = vld [vmem:[%s328 + $0xe8] sm:$0xff]
      %v366 = vld [vmem:[%s328 + $0xf0] sm:$0xff]
      %v367 = vld [vmem:[%s328 + $0xf8] sm:$0xff]
      %v368 = vld [vmem:[%s1] sm:$0x3]
      %v369 = vld [vmem:[%s2] sm:$0x1]
      %371 = vset.pattern.permute.xlu0 0
      %372 = vperm.xlu0 %371, %v336
      %v373 = vpop.permute.xlu0 %372
      %376 = vset.pattern.permute.xlu0 0
      %377 = vperm.xlu0 %376, %v337
      %v378 = vpop.permute.xlu0 %377
      %381 = vset.pattern.permute.xlu0 0
      %382 = vperm.xlu0 %381, %v338
      %v383 = vpop.permute.xlu0 %382
      %386 = vset.pattern.permute.xlu0 0
      %387 = vperm.xlu0 %386, %v339
      %v388 = vpop.permute.xlu0 %387
      %391 = vset.pattern.permute.xlu0 0
      %392 = vperm.xlu0 %391, %v340
      %v393 = vpop.permute.xlu0 %392
      %396 = vset.pattern.permute.xlu0 0
      %397 = vperm.xlu0 %396, %v341
      %v398 = vpop.permute.xlu0 %397
      %401 = vset.pattern.permute.xlu0 0
      %402 = vperm.xlu0 %401, %v342
      %v403 = vpop.permute.xlu0 %402
      %406 = vset.pattern.permute.xlu0 0
      %407 = vperm.xlu0 %406, %v343
      %v408 = vpop.permute.xlu0 %407
      %411 = vset.pattern.permute.xlu0 0
      %412 = vperm.xlu0 %411, %v344
      %v413 = vpop.permute.xlu0 %412
      %416 = vset.pattern.permute.xlu0 0
      %417 = vperm.xlu0 %416, %v345
      %v418 = vpop.permute.xlu0 %417
      %421 = vset.pattern.permute.xlu0 0
      %422 = vperm.xlu0 %421, %v346
      %v423 = vpop.permute.xlu0 %422
      %426 = vset.pattern.permute.xlu0 0
      %427 = vperm.xlu0 %426, %v347
      %v428 = vpop.permute.xlu0 %427
      %431 = vset.pattern.permute.xlu0 0
      %432 = vperm.xlu0 %431, %v348
      %v433 = vpop.permute.xlu0 %432
      %436 = vset.pattern.permute.xlu0 0
      %437 = vperm.xlu0 %436, %v349
      %v438 = vpop.permute.xlu0 %437
      %441 = vset.pattern.permute.xlu0 0
      %442 = vperm.xlu0 %441, %v350
      %v443 = vpop.permute.xlu0 %442
      %446 = vset.pattern.permute.xlu0 0
      %447 = vperm.xlu0 %446, %v351
      %v448 = vpop.permute.xlu0 %447
      %451 = vset.pattern.permute.xlu0 0
      %452 = vperm.xlu0 %451, %v352
      %v453 = vpop.permute.xlu0 %452
      %456 = vset.pattern.permute.xlu0 0
      %457 = vperm.xlu0 %456, %v353
      %v458 = vpop.permute.xlu0 %457
      %461 = vset.pattern.permute.xlu0 0
      %462 = vperm.xlu0 %461, %v354
      %v463 = vpop.permute.xlu0 %462
      %466 = vset.pattern.permute.xlu0 0
      %467 = vperm.xlu0 %466, %v355
      %v468 = vpop.permute.xlu0 %467
      %471 = vset.pattern.permute.xlu0 0
      %472 = vperm.xlu0 %471, %v356
      %v473 = vpop.permute.xlu0 %472
      %476 = vset.pattern.permute.xlu0 0
      %477 = vperm.xlu0 %476, %v357
      %v478 = vpop.permute.xlu0 %477
      %481 = vset.pattern.permute.xlu0 0
      %482 = vperm.xlu0 %481, %v358
      %v483 = vpop.permute.xlu0 %482
      %486 = vset.pattern.permute.xlu0 0
      %487 = vperm.xlu0 %486, %v359
      %v488 = vpop.permute.xlu0 %487
      %491 = vset.pattern.permute.xlu0 0
      %492 = vperm.xlu0 %491, %v360
      %v493 = vpop.permute.xlu0 %492
      %496 = vset.pattern.permute.xlu0 0
      %497 = vperm.xlu0 %496, %v361
      %v498 = vpop.permute.xlu0 %497
      %501 = vset.pattern.permute.xlu0 0
      %502 = vperm.xlu0 %501, %v362
      %v503 = vpop.permute.xlu0 %502
      %506 = vset.pattern.permute.xlu0 0
      %507 = vperm.xlu0 %506, %v363
      %v508 = vpop.permute.xlu0 %507
      %511 = vset.pattern.permute.xlu0 0
      %512 = vperm.xlu0 %511, %v364
      %v513 = vpop.permute.xlu0 %512
      %516 = vset.pattern.permute.xlu0 0
      %517 = vperm.xlu0 %516, %v365
      %v518 = vpop.permute.xlu0 %517
      %521 = vset.pattern.permute.xlu0 0
      %522 = vperm.xlu0 %521, %v366
      %v523 = vpop.permute.xlu0 %522
      %526 = vset.pattern.permute.xlu0 0
      %527 = vperm.xlu0 %526, %v367
      %v528 = vpop.permute.xlu0 %527
      %v530 = vlaneseq
      %v531 = vshrl.u32 %v530, 7
      %v532 = vsub.s32 0, %v531
      %v533 = vrot.slane %v368, %v532
      %v534 = vmul.f32 %v373, %v533
      %v535 = vmul.f32 %v378, %v533
      %v536 = vmul.f32 %v383, %v533
      %v537 = vmul.f32 %v388, %v533
      %v538 = vmul.f32 %v393, %v533
      %v539 = vmul.f32 %v398, %v533
      %v540 = vmul.f32 %v403, %v533
      %v541 = vmul.f32 %v408, %v533
      %v542 = vmul.f32 %v413, %v533
      %v543 = vmul.f32 %v418, %v533
      %v544 = vmul.f32 %v423, %v533
      %v545 = vmul.f32 %v428, %v533
      %v546 = vmul.f32 %v433, %v533
      %v547 = vmul.f32 %v438, %v533
      %v548 = vmul.f32 %v443, %v533
      %v549 = vmul.f32 %v448, %v533
      %v550 = vmul.f32 %v453, %v533
      %v551 = vmul.f32 %v458, %v533
      %v552 = vmul.f32 %v463, %v533
      %v553 = vmul.f32 %v468, %v533
      %v554 = vmul.f32 %v473, %v533
      %v555 = vmul.f32 %v478, %v533
      %v556 = vmul.f32 %v483, %v533
      %v557 = vmul.f32 %v488, %v533
      %v558 = vmul.f32 %v493, %v533
      %v559 = vmul.f32 %v498, %v533
      %v560 = vmul.f32 %v503, %v533
      %v561 = vmul.f32 %v508, %v533
      %v562 = vmul.f32 %v513, %v533
      %v563 = vmul.f32 %v518, %v533
      %v564 = vmul.f32 %v523, %v533
      %v565 = vmul.f32 %v528, %v533
      %566 = vset.pattern.permute.xlu0 1
      %567 = vperm.xlu0 %566, %v336
      %v568 = vpop.permute.xlu0 %567
      %570 = vset.pattern.permute.xlu0 1
      %571 = vperm.xlu0 %570, %v337
      %v572 = vpop.permute.xlu0 %571
      %574 = vset.pattern.permute.xlu0 1
      %575 = vperm.xlu0 %574, %v338
      %v576 = vpop.permute.xlu0 %575
      %578 = vset.pattern.permute.xlu0 1
      %579 = vperm.xlu0 %578, %v339
      %v580 = vpop.permute.xlu0 %579
      %582 = vset.pattern.permute.xlu0 1
      %583 = vperm.xlu0 %582, %v340
      %v584 = vpop.permute.xlu0 %583
      %586 = vset.pattern.permute.xlu0 1
      %587 = vperm.xlu0 %586, %v341
      %v588 = vpop.permute.xlu0 %587
      %590 = vset.pattern.permute.xlu0 1
      %591 = vperm.xlu0 %590, %v342
      %v592 = vpop.permute.xlu0 %591
      %594 = vset.pattern.permute.xlu0 1
      %595 = vperm.xlu0 %594, %v343
      %v596 = vpop.permute.xlu0 %595
      %598 = vset.pattern.permute.xlu0 1
      %599 = vperm.xlu0 %598, %v344
      %v600 = vpop.permute.xlu0 %599
      %602 = vset.pattern.permute.xlu0 1
      %603 = vperm.xlu0 %602, %v345
      %v604 = vpop.permute.xlu0 %603
      %606 = vset.pattern.permute.xlu0 1
      %607 = vperm.xlu0 %606, %v346
      %v608 = vpop.permute.xlu0 %607
      %610 = vset.pattern.permute.xlu0 1
      %611 = vperm.xlu0 %610, %v347
      %v612 = vpop.permute.xlu0 %611
      %614 = vset.pattern.permute.xlu0 1
      %615 = vperm.xlu0 %614, %v348
      %v616 = vpop.permute.xlu0 %615
      %618 = vset.pattern.permute.xlu0 1
      %619 = vperm.xlu0 %618, %v349
      %v620 = vpop.permute.xlu0 %619
      %622 = vset.pattern.permute.xlu0 1
      %623 = vperm.xlu0 %622, %v350
      %v624 = vpop.permute.xlu0 %623
      %626 = vset.pattern.permute.xlu0 1
      %627 = vperm.xlu0 %626, %v351
      %v628 = vpop.permute.xlu0 %627
      %630 = vset.pattern.permute.xlu0 1
      %631 = vperm.xlu0 %630, %v352
      %v632 = vpop.permute.xlu0 %631
      %634 = vset.pattern.permute.xlu0 1
      %635 = vperm.xlu0 %634, %v353
      %v636 = vpop.permute.xlu0 %635
      %638 = vset.pattern.permute.xlu0 1
      %639 = vperm.xlu0 %638, %v354
      %v640 = vpop.permute.xlu0 %639
      %642 = vset.pattern.permute.xlu0 1
      %643 = vperm.xlu0 %642, %v355
      %v644 = vpop.permute.xlu0 %643
      %646 = vset.pattern.permute.xlu0 1
      %647 = vperm.xlu0 %646, %v356
      %v648 = vpop.permute.xlu0 %647
      %650 = vset.pattern.permute.xlu0 1
      %651 = vperm.xlu0 %650, %v357
      %v652 = vpop.permute.xlu0 %651
      %654 = vset.pattern.permute.xlu0 1
      %655 = vperm.xlu0 %654, %v358
      %v656 = vpop.permute.xlu0 %655
      %658 = vset.pattern.permute.xlu0 1
      %659 = vperm.xlu0 %658, %v359
      %v660 = vpop.permute.xlu0 %659
      %662 = vset.pattern.permute.xlu0 1
      %663 = vperm.xlu0 %662, %v360
      %v664 = vpop.permute.xlu0 %663
      %666 = vset.pattern.permute.xlu0 1
      %667 = vperm.xlu0 %666, %v361
      %v668 = vpop.permute.xlu0 %667
      %670 = vset.pattern.permute.xlu0 1
      %671 = vperm.xlu0 %670, %v362
      %v672 = vpop.permute.xlu0 %671
      %674 = vset.pattern.permute.xlu0 1
      %675 = vperm.xlu0 %674, %v363
      %v676 = vpop.permute.xlu0 %675
      %678 = vset.pattern.permute.xlu0 1
      %679 = vperm.xlu0 %678, %v364
      %v680 = vpop.permute.xlu0 %679
      %682 = vset.pattern.permute.xlu0 1
      %683 = vperm.xlu0 %682, %v365
      %v684 = vpop.permute.xlu0 %683
      %686 = vset.pattern.permute.xlu0 1
      %687 = vperm.xlu0 %686, %v366
      %v688 = vpop.permute.xlu0 %687
      %690 = vset.pattern.permute.xlu0 1
      %691 = vperm.xlu0 %690, %v367
      %v692 = vpop.permute.xlu0 %691
      %v694 = vlaneseq
      %v695 = vshrl.u32 %v694, 7
      %v696 = vsub.s32 1, %v695
      %v697 = vrot.slane %v368, %v696
      %v698 = vmul.f32 %v568, %v697
      %v699 = vmul.f32 %v572, %v697
      %v700 = vmul.f32 %v576, %v697
      %v701 = vmul.f32 %v580, %v697
      %v702 = vmul.f32 %v584, %v697
      %v703 = vmul.f32 %v588, %v697
      %v704 = vmul.f32 %v592, %v697
      %v705 = vmul.f32 %v596, %v697
      %v706 = vmul.f32 %v600, %v697
      %v707 = vmul.f32 %v604, %v697
      %v708 = vmul.f32 %v608, %v697
      %v709 = vmul.f32 %v612, %v697
      %v710 = vmul.f32 %v616, %v697
      %v711 = vmul.f32 %v620, %v697
      %v712 = vmul.f32 %v624, %v697
      %v713 = vmul.f32 %v628, %v697
      %v714 = vmul.f32 %v632, %v697
      %v715 = vmul.f32 %v636, %v697
      %v716 = vmul.f32 %v640, %v697
      %v717 = vmul.f32 %v644, %v697
      %v718 = vmul.f32 %v648, %v697
      %v719 = vmul.f32 %v652, %v697
      %v720 = vmul.f32 %v656, %v697
      %v721 = vmul.f32 %v660, %v697
      %v722 = vmul.f32 %v664, %v697
      %v723 = vmul.f32 %v668, %v697
      %v724 = vmul.f32 %v672, %v697
      %v725 = vmul.f32 %v676, %v697
      %v726 = vmul.f32 %v680, %v697
      %v727 = vmul.f32 %v684, %v697
      %v728 = vmul.f32 %v688, %v697
      %v729 = vmul.f32 %v692, %v697
      %v730 = vadd.f32 %v534, %v698
      %v731 = vadd.f32 %v535, %v699
      %v732 = vadd.f32 %v536, %v700
      %v733 = vadd.f32 %v537, %v701
      %v734 = vadd.f32 %v538, %v702
      %v735 = vadd.f32 %v539, %v703
      %v736 = vadd.f32 %v540, %v704
      %v737 = vadd.f32 %v541, %v705
      %v738 = vadd.f32 %v542, %v706
      %v739 = vadd.f32 %v543, %v707
      %v740 = vadd.f32 %v544, %v708
      %v741 = vadd.f32 %v545, %v709
      %v742 = vadd.f32 %v546, %v710
      %v743 = vadd.f32 %v547, %v711
      %v744 = vadd.f32 %v548, %v712
      %v745 = vadd.f32 %v549, %v713
      %v746 = vadd.f32 %v550, %v714
      %v747 = vadd.f32 %v551, %v715
      %v748 = vadd.f32 %v552, %v716
      %v749 = vadd.f32 %v553, %v717
      %v750 = vadd.f32 %v554, %v718
      %v751 = vadd.f32 %v555, %v719
      %v752 = vadd.f32 %v556, %v720
      %v753 = vadd.f32 %v557, %v721
      %v754 = vadd.f32 %v558, %v722
      %v755 = vadd.f32 %v559, %v723
      %v756 = vadd.f32 %v560, %v724
      %v757 = vadd.f32 %v561, %v725
      %v758 = vadd.f32 %v562, %v726
      %v759 = vadd.f32 %v563, %v727
      %v760 = vadd.f32 %v564, %v728
      %v761 = vadd.f32 %v565, %v729
      %v763 = vlaneseq
      %v764 = vshrl.u32 %v763, 7
      %v765 = vsub.s32 0, %v764
      %v766 = vrot.slane %v369, %v765
      %v768 = vadd.f32 %v730, %v766
      %v769 = vadd.f32 %v731, %v766
      %v770 = vadd.f32 %v732, %v766
      %v771 = vadd.f32 %v733, %v766
      %v772 = vadd.f32 %v734, %v766
      %v773 = vadd.f32 %v735, %v766
      %v774 = vadd.f32 %v736, %v766
      %v775 = vadd.f32 %v737, %v766
      %v776 = vadd.f32 %v738, %v766
      %v777 = vadd.f32 %v739, %v766
      %v778 = vadd.f32 %v740, %v766
      %v779 = vadd.f32 %v741, %v766
      %v780 = vadd.f32 %v742, %v766
      %v781 = vadd.f32 %v743, %v766
      %v782 = vadd.f32 %v744, %v766
      %v783 = vadd.f32 %v745, %v766
      %v784 = vadd.f32 %v746, %v766
      %v785 = vadd.f32 %v747, %v766
      %v786 = vadd.f32 %v748, %v766
      %v787 = vadd.f32 %v749, %v766
      %v788 = vadd.f32 %v750, %v766
      %v789 = vadd.f32 %v751, %v766
      %v790 = vadd.f32 %v752, %v766
      %v791 = vadd.f32 %v753, %v766
      %v792 = vadd.f32 %v754, %v766
      %v793 = vadd.f32 %v755, %v766
      %v794 = vadd.f32 %v756, %v766
      %v795 = vadd.f32 %v757, %v766
      %v796 = vadd.f32 %v758, %v766
      %v797 = vadd.f32 %v759, %v766
      %v798 = vadd.f32 %v760, %v766
      %v799 = vadd.f32 %v761, %v766
      %v800 = vmax.f32 %v768, 0.0
      %v801 = vmax.f32 %v769, 0.0
      %v802 = vmax.f32 %v770, 0.0
      %v803 = vmax.f32 %v771, 0.0
      %v804 = vmax.f32 %v772, 0.0
      %v805 = vmax.f32 %v773, 0.0
      %v806 = vmax.f32 %v774, 0.0
      %v807 = vmax.f32 %v775, 0.0
      %v808 = vmax.f32 %v776, 0.0
      %v809 = vmax.f32 %v777, 0.0
      %v810 = vmax.f32 %v778, 0.0
      %v811 = vmax.f32 %v779, 0.0
      %v812 = vmax.f32 %v780, 0.0
      %v813 = vmax.f32 %v781, 0.0
      %v814 = vmax.f32 %v782, 0.0
      %v815 = vmax.f32 %v783, 0.0
      %v816 = vmax.f32 %v784, 0.0
      %v817 = vmax.f32 %v785, 0.0
      %v818 = vmax.f32 %v786, 0.0
      %v819 = vmax.f32 %v787, 0.0
      %v820 = vmax.f32 %v788, 0.0
      %v821 = vmax.f32 %v789, 0.0
      %v822 = vmax.f32 %v790, 0.0
      %v823 = vmax.f32 %v791, 0.0
      %v824 = vmax.f32 %v792, 0.0
      %v825 = vmax.f32 %v793, 0.0
      %v826 = vmax.f32 %v794, 0.0
      %v827 = vmax.f32 %v795, 0.0
      %v828 = vmax.f32 %v796, 0.0
      %v829 = vmax.f32 %v797, 0.0
      %v830 = vmax.f32 %v798, 0.0
      %v831 = vmax.f32 %v799, 0.0
      %v832 = vld [vmem:[%s3] sm:$0xff]
      %v833 = vld [vmem:[%s3 + $0x8] sm:$0xff]
      %v834 = vld [vmem:[%s3 + $0x10] sm:$0xff]
      %v835 = vld [vmem:[%s3 + $0x18] sm:$0xff]
      %v836 = vld [vmem:[%s3 + $0x20] sm:$0xff]
      %v837 = vld [vmem:[%s3 + $0x28] sm:$0xff]
      %v838 = vld [vmem:[%s3 + $0x30] sm:$0xff]
      %v839 = vld [vmem:[%s3 + $0x38] sm:$0xff]
      %v840 = vld [vmem:[%s3 + $0x40] sm:$0xff]
      %v841 = vld [vmem:[%s3 + $0x48] sm:$0xff]
      %v842 = vld [vmem:[%s3 + $0x50] sm:$0xff]
      %v843 = vld [vmem:[%s3 + $0x58] sm:$0xff]
      %v844 = vld [vmem:[%s3 + $0x60] sm:$0xff]
      %v845 = vld [vmem:[%s3 + $0x68] sm:$0xff]
      %v846 = vld [vmem:[%s3 + $0x70] sm:$0xff]
      %v847 = vld [vmem:[%s3 + $0x78] sm:$0xff]
      %v848 = vld [vmem:[%s4] sm:$0x1]
      %v850 = vlaneseq
      %v851 = vshrl.u32 %v850, 7
      %v852 = vsub.s32 0, %v851
      %v853 = vrot.slane %v848, %v852
      %855 = vmatprep.subr.mxu0 0.0
      %856 = vmatpush1.msra.mxu0 %v832
      %857 = vmatprep.subr.mxu0 0.0
      %858 = vmatpush1.msra.mxu0 %v833
      %859 = vmatprep.subr.mxu0 0.0
      %860 = vmatpush1.msra.mxu0 %v834
      %861 = vmatprep.subr.mxu0 0.0
      %862 = vmatpush1.msra.mxu0 %v835
      %863 = vmatprep.subr.mxu0 0.0
      %864 = vmatpush1.msra.mxu0 %v836
      %865 = vmatprep.subr.mxu0 0.0
      %866 = vmatpush1.msra.mxu0 %v837
      %867 = vmatprep.subr.mxu0 0.0
      %868 = vmatpush1.msra.mxu0 %v838
      %869 = vmatprep.subr.mxu0 0.0
      %870 = vmatpush1.msra.mxu0 %v839
      %871 = vmatprep.subr.mxu0 0.0
      %872 = vmatpush1.msra.mxu0 %v840
      %873 = vmatprep.subr.mxu0 0.0
      %874 = vmatpush1.msra.mxu0 %v841
      %875 = vmatprep.subr.mxu0 0.0
      %876 = vmatpush1.msra.mxu0 %v842
      %877 = vmatprep.subr.mxu0 0.0
      %878 = vmatpush1.msra.mxu0 %v843
      %879 = vmatprep.subr.mxu0 0.0
      %880 = vmatpush1.msra.mxu0 %v844
      %881 = vmatprep.subr.mxu0 0.0
      %882 = vmatpush1.msra.mxu0 %v845
      %883 = vmatprep.subr.mxu0 0.0
      %884 = vmatpush1.msra.mxu0 %v846
      %885 = vmatprep.subr.mxu0 0.0
      %886 = vmatpush1.msra.mxu0 %v847
      %887 = vmatprep.subr.mxu0 0.0
      %888 = vmatpush1.msra.mxu0 0.0
      %889 = vmatprep.subr.mxu0 0.0
      %890 = vmatpush1.msra.mxu0 0.0
      %891 = vmatprep.subr.mxu0 0.0
      %892 = vmatpush1.msra.mxu0 0.0
      %893 = vmatprep.subr.mxu0 0.0
      %894 = vmatpush1.msra.mxu0 0.0
      %895 = vmatprep.subr.mxu0 0.0
      %896 = vmatpush1.msra.mxu0 0.0
      %897 = vmatprep.subr.mxu0 0.0
      %898 = vmatpush1.msra.mxu0 0.0
      %899 = vmatprep.subr.mxu0 0.0
      %900 = vmatpush1.msra.mxu0 0.0
      %901 = vmatprep.subr.mxu0 0.0
      %902 = vmatpush1.msra.mxu0 0.0
      %903 = vmatprep.subr.mxu0 0.0
      %904 = vmatpush1.msra.mxu0 0.0
      %905 = vmatprep.subr.mxu0 0.0
      %906 = vmatpush1.msra.mxu0 0.0
      %907 = vmatprep.subr.mxu0 0.0
      %908 = vmatpush1.msra.mxu0 0.0
      %909 = vmatprep.subr.mxu0 0.0
      %910 = vmatpush1.msra.mxu0 0.0
      %911 = vmatprep.subr.mxu0 0.0
      %912 = vmatpush1.msra.mxu0 0.0
      %913 = vmatprep.subr.mxu0 0.0
      %914 = vmatpush1.msra.mxu0 0.0
      %915 = vmatprep.subr.mxu0 0.0
      %916 = vmatpush1.msra.mxu0 0.0
      %917 = vmatprep.subr.mxu0 0.0
      %918 = vmatpush1.msra.mxu0 0.0
      %919 = vmatprep.mubr.f32.mxu0 0.0
      %920 = vmatmul.mubr.f32.gmra.mrb[0].mxu0 %v800
      %v921 = vpop.f32.mrb[0].mxu0
      %v922 = vadd.f32 %v853, %v921
      %v923 = vpop.f32.mrb[0].mxu0
      %924 = vmatprep.mubr.f32.mxu0 0.0
      %925 = vmatmul.mubr.f32.gmra.mrb[0].mxu0 %v801
      %v926 = vpop.f32.mrb[0].mxu0
      %v927 = vadd.f32 %v853, %v926
      %v928 = vpop.f32.mrb[0].mxu0
      %929 = vmatprep.mubr.f32.mxu0 0.0
      %930 = vmatmul.mubr.f32.gmra.mrb[0].mxu0 %v802
      %v931 = vpop.f32.mrb[0].mxu0
      %v932 = vadd.f32 %v853, %v931
      %v933 = vpop.f32.mrb[0].mxu0
      %934 = vmatprep.mubr.f32.mxu0 0.0
      %935 = vmatmul.mubr.f32.gmra.mrb[0].mxu0 %v803
      %v936 = vpop.f32.mrb[0].mxu0
      %v937 = vadd.f32 %v853, %v936
      %v938 = vpop.f32.mrb[0].mxu0
      %939 = vmatprep.mubr.f32.mxu0 0.0
      %940 = vmatmul.mubr.f32.gmra.mrb[0].mxu0 %v804
      %v941 = vpop.f32.mrb[0].mxu0
      %v942 = vadd.f32 %v853, %v941
      %v943 = vpop.f32.mrb[0].mxu0
      %944 = vmatprep.mubr.f32.mxu0 0.0
      %945 = vmatmul.mubr.f32.gmra.mrb[0].mxu0 %v805
      %v946 = vpop.f32.mrb[0].mxu0
      %v947 = vadd.f32 %v853, %v946
      %v948 = vpop.f32.mrb[0].mxu0
      %949 = vmatprep.mubr.f32.mxu0 0.0
      %950 = vmatmul.mubr.f32.gmra.mrb[0].mxu0 %v806
      %v951 = vpop.f32.mrb[0].mxu0
      %v952 = vadd.f32 %v853, %v951
      %v953 = vpop.f32.mrb[0].mxu0
      %954 = vmatprep.mubr.f32.mxu0 0.0
      %955 = vmatmul.mubr.f32.gmra.mrb[0].mxu0 %v807
      %v956 = vpop.f32.mrb[0].mxu0
      %v957 = vadd.f32 %v853, %v956
      %v958 = vpop.f32.mrb[0].mxu0
      %959 = vmatprep.mubr.f32.mxu0 0.0
      %960 = vmatmul.mubr.f32.gmra.mrb[0].mxu0 %v808
      %v961 = vpop.f32.mrb[0].mxu0
      %v962 = vadd.f32 %v853, %v961
      %v963 = vpop.f32.mrb[0].mxu0
      %964 = vmatprep.mubr.f32.mxu0 0.0
      %965 = vmatmul.mubr.f32.gmra.mrb[0].mxu0 %v809
      %v966 = vpop.f32.mrb[0].mxu0
      %v967 = vadd.f32 %v853, %v966
      %v968 = vpop.f32.mrb[0].mxu0
      %969 = vmatprep.mubr.f32.mxu0 0.0
      %970 = vmatmul.mubr.f32.gmra.mrb[0].mxu0 %v810
      %v971 = vpop.f32.mrb[0].mxu0
      %v972 = vadd.f32 %v853, %v971
      %v973 = vpop.f32.mrb[0].mxu0
      %974 = vmatprep.mubr.f32.mxu0 0.0
      %975 = vmatmul.mubr.f32.gmra.mrb[0].mxu0 %v811
      %v976 = vpop.f32.mrb[0].mxu0
      %v977 = vadd.f32 %v853, %v976
      %v978 = vpop.f32.mrb[0].mxu0
      %979 = vmatprep.mubr.f32.mxu0 0.0
      %980 = vmatmul.mubr.f32.gmra.mrb[0].mxu0 %v812
      %v981 = vpop.f32.mrb[0].mxu0
      %v982 = vadd.f32 %v853, %v981
      %v983 = vpop.f32.mrb[0].mxu0
      %984 = vmatprep.mubr.f32.mxu0 0.0
      %985 = vmatmul.mubr.f32.gmra.mrb[0].mxu0 %v813
      %v986 = vpop.f32.mrb[0].mxu0
      %v987 = vadd.f32 %v853, %v986
      %v988 = vpop.f32.mrb[0].mxu0
      %989 = vmatprep.mubr.f32.mxu0 0.0
      %990 = vmatmul.mubr.f32.gmra.mrb[0].mxu0 %v814
      %v991 = vpop.f32.mrb[0].mxu0
      %v992 = vadd.f32 %v853, %v991
      %v993 = vpop.f32.mrb[0].mxu0
      %994 = vmatprep.mubr.f32.mxu0 0.0
      %995 = vmatmul.mubr.f32.gmra.mrb[0].mxu0 %v815
      %v996 = vpop.f32.mrb[0].mxu0
      %v997 = vadd.f32 %v853, %v996
      %v998 = vpop.f32.mrb[0].mxu0
      %999 = vmatprep.mubr.f32.mxu0 0.0
      %1000 = vmatmul.mubr.f32.gmra.mrb[0].mxu0 %v816
      %v1001 = vpop.f32.mrb[0].mxu0
      %v1002 = vadd.f32 %v853, %v1001
      %v1003 = vpop.f32.mrb[0].mxu0
      %1004 = vmatprep.mubr.f32.mxu0 0.0
      %1005 = vmatmul.mubr.f32.gmra.mrb[0].mxu0 %v817
      %v1006 = vpop.f32.mrb[0].mxu0
      %v1007 = vadd.f32 %v853, %v1006
      %v1008 = vpop.f32.mrb[0].mxu0
      %1009 = vmatprep.mubr.f32.mxu0 0.0
      %1010 = vmatmul.mubr.f32.gmra.mrb[0].mxu0 %v818
      %v1011 = vpop.f32.mrb[0].mxu0
      %v1012 = vadd.f32 %v853, %v1011
      %v1013 = vpop.f32.mrb[0].mxu0
      %1014 = vmatprep.mubr.f32.mxu0 0.0
      %1015 = vmatmul.mubr.f32.gmra.mrb[0].mxu0 %v819
      %v1016 = vpop.f32.mrb[0].mxu0
      %v1017 = vadd.f32 %v853, %v1016
      %v1018 = vpop.f32.mrb[0].mxu0
      %1019 = vmatprep.mubr.f32.mxu0 0.0
      %1020 = vmatmul.mubr.f32.gmra.mrb[0].mxu0 %v820
      %v1021 = vpop.f32.mrb[0].mxu0
      %v1022 = vadd.f32 %v853, %v1021
      %v1023 = vpop.f32.mrb[0].mxu0
      %1024 = vmatprep.mubr.f32.mxu0 0.0
      %1025 = vmatmul.mubr.f32.gmra.mrb[0].mxu0 %v821
      %v1026 = vpop.f32.mrb[0].mxu0
      %v1027 = vadd.f32 %v853, %v1026
      %v1028 = vpop.f32.mrb[0].mxu0
      %1029 = vmatprep.mubr.f32.mxu0 0.0
      %1030 = vmatmul.mubr.f32.gmra.mrb[0].mxu0 %v822
      %v1031 = vpop.f32.mrb[0].mxu0
      %v1032 = vadd.f32 %v853, %v1031
      %v1033 = vpop.f32.mrb[0].mxu0
      %1034 = vmatprep.mubr.f32.mxu0 0.0
      %1035 = vmatmul.mubr.f32.gmra.mrb[0].mxu0 %v823
      %v1036 = vpop.f32.mrb[0].mxu0
      %v1037 = vadd.f32 %v853, %v1036
      %v1038 = vpop.f32.mrb[0].mxu0
      %1039 = vmatprep.mubr.f32.mxu0 0.0
      %1040 = vmatmul.mubr.f32.gmra.mrb[0].mxu0 %v824
      %v1041 = vpop.f32.mrb[0].mxu0
      %v1042 = vadd.f32 %v853, %v1041
      %v1043 = vpop.f32.mrb[0].mxu0
      %1044 = vmatprep.mubr.f32.mxu0 0.0
      %1045 = vmatmul.mubr.f32.gmra.mrb[0].mxu0 %v825
      %v1046 = vpop.f32.mrb[0].mxu0
      %v1047 = vadd.f32 %v853, %v1046
      %v1048 = vpop.f32.mrb[0].mxu0
      %1049 = vmatprep.mubr.f32.mxu0 0.0
      %1050 = vmatmul.mubr.f32.gmra.mrb[0].mxu0 %v826
      %v1051 = vpop.f32.mrb[0].mxu0
      %v1052 = vadd.f32 %v853, %v1051
      %v1053 = vpop.f32.mrb[0].mxu0
      %1054 = vmatprep.mubr.f32.mxu0 0.0
      %1055 = vmatmul.mubr.f32.gmra.mrb[0].mxu0 %v827
      %v1056 = vpop.f32.mrb[0].mxu0
      %v1057 = vadd.f32 %v853, %v1056
      %v1058 = vpop.f32.mrb[0].mxu0
      %1059 = vmatprep.mubr.f32.mxu0 0.0
      %1060 = vmatmul.mubr.f32.gmra.mrb[0].mxu0 %v828
      %v1061 = vpop.f32.mrb[0].mxu0
      %v1062 = vadd.f32 %v853, %v1061
      %v1063 = vpop.f32.mrb[0].mxu0
      %1064 = vmatprep.mubr.f32.mxu0 0.0
      %1065 = vmatmul.mubr.f32.gmra.mrb[0].mxu0 %v829
      %v1066 = vpop.f32.mrb[0].mxu0
      %v1067 = vadd.f32 %v853, %v1066
      %v1068 = vpop.f32.mrb[0].mxu0
      %1069 = vmatprep.mubr.f32.mxu0 0.0
      %1070 = vmatmul.mubr.f32.gmra.mrb[0].mxu0 %v830
      %v1071 = vpop.f32.mrb[0].mxu0
      %v1072 = vadd.f32 %v853, %v1071
      %v1073 = vpop.f32.mrb[0].mxu0
      %1074 = vmatprep.mubr.f32.mxu0 0.0
      %1075 = vmatmul.mubr.f32.gmra.mrb[0].mxu0 %v831
      %v1076 = vpop.f32.mrb[0].mxu0
      %v1077 = vadd.f32 %v853, %v1076
      %v1078 = vpop.f32.mrb[0].mxu0
      %1079 = vdwg.mxu0
      %v1080 = vmax.f32 %v922, 0.0
      %v1081 = vmax.f32 %v927, 0.0
      %v1082 = vmax.f32 %v932, 0.0
      %v1083 = vmax.f32 %v937, 0.0
      %v1084 = vmax.f32 %v942, 0.0
      %v1085 = vmax.f32 %v947, 0.0
      %v1086 = vmax.f32 %v952, 0.0
      %v1087 = vmax.f32 %v957, 0.0
      %v1088 = vmax.f32 %v962, 0.0
      %v1089 = vmax.f32 %v967, 0.0
      %v1090 = vmax.f32 %v972, 0.0
      %v1091 = vmax.f32 %v977, 0.0
      %v1092 = vmax.f32 %v982, 0.0
      %v1093 = vmax.f32 %v987, 0.0
      %v1094 = vmax.f32 %v992, 0.0
      %v1095 = vmax.f32 %v997, 0.0
      %v1096 = vmax.f32 %v1002, 0.0
      %v1097 = vmax.f32 %v1007, 0.0
      %v1098 = vmax.f32 %v1012, 0.0
      %v1099 = vmax.f32 %v1017, 0.0
      %v1100 = vmax.f32 %v1022, 0.0
      %v1101 = vmax.f32 %v1027, 0.0
      %v1102 = vmax.f32 %v1032, 0.0
      %v1103 = vmax.f32 %v1037, 0.0
      %v1104 = vmax.f32 %v1042, 0.0
      %v1105 = vmax.f32 %v1047, 0.0
      %v1106 = vmax.f32 %v1052, 0.0
      %v1107 = vmax.f32 %v1057, 0.0
      %v1108 = vmax.f32 %v1062, 0.0
      %v1109 = vmax.f32 %v1067, 0.0
      %v1110 = vmax.f32 %v1072, 0.0
      %v1111 = vmax.f32 %v1077, 0.0
      %v1112 = vld [vmem:[%s5] sm:$0xff]
      %v1113 = vld [vmem:[%s5 + $0x8] sm:$0xff]
      %v1114 = vld [vmem:[%s5 + $0x10] sm:$0xff]
      %v1115 = vld [vmem:[%s5 + $0x18] sm:$0xff]
      %v1116 = vld [vmem:[%s5 + $0x20] sm:$0xff]
      %v1117 = vld [vmem:[%s5 + $0x28] sm:$0xff]
      %v1118 = vld [vmem:[%s5 + $0x30] sm:$0xff]
      %v1119 = vld [vmem:[%s5 + $0x38] sm:$0xff]
      %v1120 = vld [vmem:[%s5 + $0x40] sm:$0xff]
      %v1121 = vld [vmem:[%s5 + $0x48] sm:$0xff]
      %v1122 = vld [vmem:[%s5 + $0x50] sm:$0xff]
      %v1123 = vld [vmem:[%s5 + $0x58] sm:$0xff]
      %v1124 = vld [vmem:[%s5 + $0x60] sm:$0xff]
      %v1125 = vld [vmem:[%s5 + $0x68] sm:$0xff]
      %v1126 = vld [vmem:[%s5 + $0x70] sm:$0xff]
      %v1127 = vld [vmem:[%s5 + $0x78] sm:$0xff]
      %v1128 = vld [vmem:[%s6] sm:$0x1]
      %v1130 = vlaneseq
      %v1131 = vshrl.u32 %v1130, 7
      %v1132 = vsub.s32 0, %v1131
      %v1133 = vrot.slane %v1128, %v1132
      %1135 = vmatprep.subr.mxu0 0.0
      %1136 = vmatpush1.msra.mxu0 %v1112
      %1137 = vmatprep.subr.mxu0 0.0
      %1138 = vmatpush1.msra.mxu0 %v1113
      %1139 = vmatprep.subr.mxu0 0.0
      %1140 = vmatpush1.msra.mxu0 %v1114
      %1141 = vmatprep.subr.mxu0 0.0
      %1142 = vmatpush1.msra.mxu0 %v1115
      %1143 = vmatprep.subr.mxu0 0.0
      %1144 = vmatpush1.msra.mxu0 %v1116
      %1145 = vmatprep.subr.mxu0 0.0
      %1146 = vmatpush1.msra.mxu0 %v1117
      %1147 = vmatprep.subr.mxu0 0.0
      %1148 = vmatpush1.msra.mxu0 %v1118
      %1149 = vmatprep.subr.mxu0 0.0
      %1150 = vmatpush1.msra.mxu0 %v1119
      %1151 = vmatprep.subr.mxu0 0.0
      %1152 = vmatpush1.msra.mxu0 %v1120
      %1153 = vmatprep.subr.mxu0 0.0
      %1154 = vmatpush1.msra.mxu0 %v1121
      %1155 = vmatprep.subr.mxu0 0.0
      %1156 = vmatpush1.msra.mxu0 %v1122
      %1157 = vmatprep.subr.mxu0 0.0
      %1158 = vmatpush1.msra.mxu0 %v1123
      %1159 = vmatprep.subr.mxu0 0.0
      %1160 = vmatpush1.msra.mxu0 %v1124
      %1161 = vmatprep.subr.mxu0 0.0
      %1162 = vmatpush1.msra.mxu0 %v1125
      %1163 = vmatprep.subr.mxu0 0.0
      %1164 = vmatpush1.msra.mxu0 %v1126
      %1165 = vmatprep.subr.mxu0 0.0
      %1166 = vmatpush1.msra.mxu0 %v1127
      %1167 = vmatprep.subr.mxu0 0.0
      %1168 = vmatpush1.msra.mxu0 0.0
      %1169 = vmatprep.subr.mxu0 0.0
      %1170 = vmatpush1.msra.mxu0 0.0
      %1171 = vmatprep.subr.mxu0 0.0
      %1172 = vmatpush1.msra.mxu0 0.0
      %1173 = vmatprep.subr.mxu0 0.0
      %1174 = vmatpush1.msra.mxu0 0.0
      %1175 = vmatprep.subr.mxu0 0.0
      %1176 = vmatpush1.msra.mxu0 0.0
      %1177 = vmatprep.subr.mxu0 0.0
      %1178 = vmatpush1.msra.mxu0 0.0
      %1179 = vmatprep.subr.mxu0 0.0
      %1180 = vmatpush1.msra.mxu0 0.0
      %1181 = vmatprep.subr.mxu0 0.0
      %1182 = vmatpush1.msra.mxu0 0.0
      %1183 = vmatprep.subr.mxu0 0.0
      %1184 = vmatpush1.msra.mxu0 0.0
      %1185 = vmatprep.subr.mxu0 0.0
      %1186 = vmatpush1.msra.mxu0 0.0
      %1187 = vmatprep.subr.mxu0 0.0
      %1188 = vmatpush1.msra.mxu0 0.0
      %1189 = vmatprep.subr.mxu0 0.0
      %1190 = vmatpush1.msra.mxu0 0.0
      %1191 = vmatprep.subr.mxu0 0.0
      %1192 = vmatpush1.msra.mxu0 0.0
      %1193 = vmatprep.subr.mxu0 0.0
      %1194 = vmatpush1.msra.mxu0 0.0
      %1195 = vmatprep.subr.mxu0 0.0
      %1196 = vmatpush1.msra.mxu0 0.0
      %1197 = vmatprep.subr.mxu0 0.0
      %1198 = vmatpush1.msra.mxu0 0.0
      %1199 = vmatprep.mubr.f32.mxu0 0.0
      %1200 = vmatmul.mubr.f32.gmra.mrb[0].mxu0 %v1080
      %v1201 = vpop.f32.mrb[0].mxu0
      %v1202 = vadd.f32 %v1133, %v1201
      %v1203 = vpop.f32.mrb[0].mxu0
      %1204 = vmatprep.mubr.f32.mxu0 0.0
      %1205 = vmatmul.mubr.f32.gmra.mrb[0].mxu0 %v1081
      %v1206 = vpop.f32.mrb[0].mxu0
      %v1207 = vadd.f32 %v1133, %v1206
      %v1208 = vpop.f32.mrb[0].mxu0
      %1209 = vmatprep.mubr.f32.mxu0 0.0
      %1210 = vmatmul.mubr.f32.gmra.mrb[0].mxu0 %v1082
      %v1211 = vpop.f32.mrb[0].mxu0
      %v1212 = vadd.f32 %v1133, %v1211
      %v1213 = vpop.f32.mrb[0].mxu0
      %1214 = vmatprep.mubr.f32.mxu0 0.0
      %1215 = vmatmul.mubr.f32.gmra.mrb[0].mxu0 %v1083
      %v1216 = vpop.f32.mrb[0].mxu0
      %v1217 = vadd.f32 %v1133, %v1216
      %v1218 = vpop.f32.mrb[0].mxu0
      %1219 = vmatprep.mubr.f32.mxu0 0.0
      %1220 = vmatmul.mubr.f32.gmra.mrb[0].mxu0 %v1084
      %v1221 = vpop.f32.mrb[0].mxu0
      %v1222 = vadd.f32 %v1133, %v1221
      %v1223 = vpop.f32.mrb[0].mxu0
      %1224 = vmatprep.mubr.f32.mxu0 0.0
      %1225 = vmatmul.mubr.f32.gmra.mrb[0].mxu0 %v1085
      %v1226 = vpop.f32.mrb[0].mxu0
      %v1227 = vadd.f32 %v1133, %v1226
      %v1228 = vpop.f32.mrb[0].mxu0
      %1229 = vmatprep.mubr.f32.mxu0 0.0
      %1230 = vmatmul.mubr.f32.gmra.mrb[0].mxu0 %v1086
      %v1231 = vpop.f32.mrb[0].mxu0
      %v1232 = vadd.f32 %v1133, %v1231
      %v1233 = vpop.f32.mrb[0].mxu0
      %1234 = vmatprep.mubr.f32.mxu0 0.0
      %1235 = vmatmul.mubr.f32.gmra.mrb[0].mxu0 %v1087
      %v1236 = vpop.f32.mrb[0].mxu0
      %v1237 = vadd.f32 %v1133, %v1236
      %v1238 = vpop.f32.mrb[0].mxu0
      %1239 = vmatprep.mubr.f32.mxu0 0.0
      %1240 = vmatmul.mubr.f32.gmra.mrb[0].mxu0 %v1088
      %v1241 = vpop.f32.mrb[0].mxu0
      %v1242 = vadd.f32 %v1133, %v1241
      %v1243 = vpop.f32.mrb[0].mxu0
      %1244 = vmatprep.mubr.f32.mxu0 0.0
      %1245 = vmatmul.mubr.f32.gmra.mrb[0].mxu0 %v1089
      %v1246 = vpop.f32.mrb[0].mxu0
      %v1247 = vadd.f32 %v1133, %v1246
      %v1248 = vpop.f32.mrb[0].mxu0
      %1249 = vmatprep.mubr.f32.mxu0 0.0
      %1250 = vmatmul.mubr.f32.gmra.mrb[0].mxu0 %v1090
      %v1251 = vpop.f32.mrb[0].mxu0
      %v1252 = vadd.f32 %v1133, %v1251
      %v1253 = vpop.f32.mrb[0].mxu0
      %1254 = vmatprep.mubr.f32.mxu0 0.0
      %1255 = vmatmul.mubr.f32.gmra.mrb[0].mxu0 %v1091
      %v1256 = vpop.f32.mrb[0].mxu0
      %v1257 = vadd.f32 %v1133, %v1256
      %v1258 = vpop.f32.mrb[0].mxu0
      %1259 = vmatprep.mubr.f32.mxu0 0.0
      %1260 = vmatmul.mubr.f32.gmra.mrb[0].mxu0 %v1092
      %v1261 = vpop.f32.mrb[0].mxu0
      %v1262 = vadd.f32 %v1133, %v1261
      %v1263 = vpop.f32.mrb[0].mxu0
      %1264 = vmatprep.mubr.f32.mxu0 0.0
      %1265 = vmatmul.mubr.f32.gmra.mrb[0].mxu0 %v1093
      %v1266 = vpop.f32.mrb[0].mxu0
      %v1267 = vadd.f32 %v1133, %v1266
      %v1268 = vpop.f32.mrb[0].mxu0
      %1269 = vmatprep.mubr.f32.mxu0 0.0
      %1270 = vmatmul.mubr.f32.gmra.mrb[0].mxu0 %v1094
      %v1271 = vpop.f32.mrb[0].mxu0
      %v1272 = vadd.f32 %v1133, %v1271
      %v1273 = vpop.f32.mrb[0].mxu0
      %1274 = vmatprep.mubr.f32.mxu0 0.0
      %1275 = vmatmul.mubr.f32.gmra.mrb[0].mxu0 %v1095
      %v1276 = vpop.f32.mrb[0].mxu0
      %v1277 = vadd.f32 %v1133, %v1276
      %v1278 = vpop.f32.mrb[0].mxu0
      %1279 = vmatprep.mubr.f32.mxu0 0.0
      %1280 = vmatmul.mubr.f32.gmra.mrb[0].mxu0 %v1096
      %v1281 = vpop.f32.mrb[0].mxu0
      %v1282 = vadd.f32 %v1133, %v1281
      %v1283 = vpop.f32.mrb[0].mxu0
      %1284 = vmatprep.mubr.f32.mxu0 0.0
      %1285 = vmatmul.mubr.f32.gmra.mrb[0].mxu0 %v1097
      %v1286 = vpop.f32.mrb[0].mxu0
      %v1287 = vadd.f32 %v1133, %v1286
      %v1288 = vpop.f32.mrb[0].mxu0
      %1289 = vmatprep.mubr.f32.mxu0 0.0
      %1290 = vmatmul.mubr.f32.gmra.mrb[0].mxu0 %v1098
      %v1291 = vpop.f32.mrb[0].mxu0
      %v1292 = vadd.f32 %v1133, %v1291
      %v1293 = vpop.f32.mrb[0].mxu0
      %1294 = vmatprep.mubr.f32.mxu0 0.0
      %1295 = vmatmul.mubr.f32.gmra.mrb[0].mxu0 %v1099
      %v1296 = vpop.f32.mrb[0].mxu0
      %v1297 = vadd.f32 %v1133, %v1296
      %v1298 = vpop.f32.mrb[0].mxu0
      %1299 = vmatprep.mubr.f32.mxu0 0.0
      %1300 = vmatmul.mubr.f32.gmra.mrb[0].mxu0 %v1100
      %v1301 = vpop.f32.mrb[0].mxu0
      %v1302 = vadd.f32 %v1133, %v1301
      %v1303 = vpop.f32.mrb[0].mxu0
      %1304 = vmatprep.mubr.f32.mxu0 0.0
      %1305 = vmatmul.mubr.f32.gmra.mrb[0].mxu0 %v1101
      %v1306 = vpop.f32.mrb[0].mxu0
      %v1307 = vadd.f32 %v1133, %v1306
      %v1308 = vpop.f32.mrb[0].mxu0
      %1309 = vmatprep.mubr.f32.mxu0 0.0
      %1310 = vmatmul.mubr.f32.gmra.mrb[0].mxu0 %v1102
      %v1311 = vpop.f32.mrb[0].mxu0
      %v1312 = vadd.f32 %v1133, %v1311
      %v1313 = vpop.f32.mrb[0].mxu0
      %1314 = vmatprep.mubr.f32.mxu0 0.0
      %1315 = vmatmul.mubr.f32.gmra.mrb[0].mxu0 %v1103
      %v1316 = vpop.f32.mrb[0].mxu0
      %v1317 = vadd.f32 %v1133, %v1316
      %v1318 = vpop.f32.mrb[0].mxu0
      %1319 = vmatprep.mubr.f32.mxu0 0.0
      %1320 = vmatmul.mubr.f32.gmra.mrb[0].mxu0 %v1104
      %v1321 = vpop.f32.mrb[0].mxu0
      %v1322 = vadd.f32 %v1133, %v1321
      %v1323 = vpop.f32.mrb[0].mxu0
      %1324 = vmatprep.mubr.f32.mxu0 0.0
      %1325 = vmatmul.mubr.f32.gmra.mrb[0].mxu0 %v1105
      %v1326 = vpop.f32.mrb[0].mxu0
      %v1327 = vadd.f32 %v1133, %v1326
      %v1328 = vpop.f32.mrb[0].mxu0
      %1329 = vmatprep.mubr.f32.mxu0 0.0
      %1330 = vmatmul.mubr.f32.gmra.mrb[0].mxu0 %v1106
      %v1331 = vpop.f32.mrb[0].mxu0
      %v1332 = vadd.f32 %v1133, %v1331
      %v1333 = vpop.f32.mrb[0].mxu0
      %1334 = vmatprep.mubr.f32.mxu0 0.0
      %1335 = vmatmul.mubr.f32.gmra.mrb[0].mxu0 %v1107
      %v1336 = vpop.f32.mrb[0].mxu0
      %v1337 = vadd.f32 %v1133, %v1336
      %v1338 = vpop.f32.mrb[0].mxu0
      %1339 = vmatprep.mubr.f32.mxu0 0.0
      %1340 = vmatmul.mubr.f32.gmra.mrb[0].mxu0 %v1108
      %v1341 = vpop.f32.mrb[0].mxu0
      %v1342 = vadd.f32 %v1133, %v1341
      %v1343 = vpop.f32.mrb[0].mxu0
      %1344 = vmatprep.mubr.f32.mxu0 0.0
      %1345 = vmatmul.mubr.f32.gmra.mrb[0].mxu0 %v1109
      %v1346 = vpop.f32.mrb[0].mxu0
      %v1347 = vadd.f32 %v1133, %v1346
      %v1348 = vpop.f32.mrb[0].mxu0
      %1349 = vmatprep.mubr.f32.mxu0 0.0
      %1350 = vmatmul.mubr.f32.gmra.mrb[0].mxu0 %v1110
      %v1351 = vpop.f32.mrb[0].mxu0
      %v1352 = vadd.f32 %v1133, %v1351
      %v1353 = vpop.f32.mrb[0].mxu0
      %1354 = vmatprep.mubr.f32.mxu0 0.0
      %1355 = vmatmul.mubr.f32.gmra.mrb[0].mxu0 %v1111
      %v1356 = vpop.f32.mrb[0].mxu0
      %v1357 = vadd.f32 %v1133, %v1356
      %v1358 = vpop.f32.mrb[0].mxu0
      %1359 = vdwg.mxu0
      %v1360 = vmax.f32 %v1202, 0.0
      %v1361 = vmax.f32 %v1207, 0.0
      %v1362 = vmax.f32 %v1212, 0.0
      %v1363 = vmax.f32 %v1217, 0.0
      %v1364 = vmax.f32 %v1222, 0.0
      %v1365 = vmax.f32 %v1227, 0.0
      %v1366 = vmax.f32 %v1232, 0.0
      %v1367 = vmax.f32 %v1237, 0.0
      %v1368 = vmax.f32 %v1242, 0.0
      %v1369 = vmax.f32 %v1247, 0.0
      %v1370 = vmax.f32 %v1252, 0.0
      %v1371 = vmax.f32 %v1257, 0.0
      %v1372 = vmax.f32 %v1262, 0.0
      %v1373 = vmax.f32 %v1267, 0.0
      %v1374 = vmax.f32 %v1272, 0.0
      %v1375 = vmax.f32 %v1277, 0.0
      %v1376 = vmax.f32 %v1282, 0.0
      %v1377 = vmax.f32 %v1287, 0.0
      %v1378 = vmax.f32 %v1292, 0.0
      %v1379 = vmax.f32 %v1297, 0.0
      %v1380 = vmax.f32 %v1302, 0.0
      %v1381 = vmax.f32 %v1307, 0.0
      %v1382 = vmax.f32 %v1312, 0.0
      %v1383 = vmax.f32 %v1317, 0.0
      %v1384 = vmax.f32 %v1322, 0.0
      %v1385 = vmax.f32 %v1327, 0.0
      %v1386 = vmax.f32 %v1332, 0.0
      %v1387 = vmax.f32 %v1337, 0.0
      %v1388 = vmax.f32 %v1342, 0.0
      %v1389 = vmax.f32 %v1347, 0.0
      %v1390 = vmax.f32 %v1352, 0.0
      %v1391 = vmax.f32 %v1357, 0.0
      %v1392 = vld [vmem:[%s7] sm:$0xff]
      %v1393 = vld [vmem:[%s7 + $0x8] sm:$0xff]
      %v1394 = vld [vmem:[%s7 + $0x10] sm:$0xff]
      %v1395 = vld [vmem:[%s7 + $0x18] sm:$0xff]
      %v1396 = vld [vmem:[%s7 + $0x20] sm:$0xff]
      %v1397 = vld [vmem:[%s7 + $0x28] sm:$0xff]
      %v1398 = vld [vmem:[%s7 + $0x30] sm:$0xff]
      %v1399 = vld [vmem:[%s7 + $0x38] sm:$0xff]
      %v1400 = vld [vmem:[%s7 + $0x40] sm:$0xff]
      %v1401 = vld [vmem:[%s7 + $0x48] sm:$0xff]
      %v1402 = vld [vmem:[%s7 + $0x50] sm:$0xff]
      %v1403 = vld [vmem:[%s7 + $0x58] sm:$0xff]
      %v1404 = vld [vmem:[%s7 + $0x60] sm:$0xff]
      %v1405 = vld [vmem:[%s7 + $0x68] sm:$0xff]
      %v1406 = vld [vmem:[%s7 + $0x70] sm:$0xff]
      %v1407 = vld [vmem:[%s7 + $0x78] sm:$0xff]
      %v1408 = vld [vmem:[%s8] sm:$0x1]
      %v1410 = vlaneseq
      %v1411 = vshrl.u32 %v1410, 7
      %v1412 = vsub.s32 0, %v1411
      %v1413 = vrot.slane %v1408, %v1412
      %1415 = vmatprep.subr.mxu0 0.0
      %1416 = vmatpush1.msra.mxu0 %v1392
      %1417 = vmatprep.subr.mxu0 0.0
      %1418 = vmatpush1.msra.mxu0 %v1393
      %1419 = vmatprep.subr.mxu0 0.0
      %1420 = vmatpush1.msra.mxu0 %v1394
      %1421 = vmatprep.subr.mxu0 0.0
      %1422 = vmatpush1.msra.mxu0 %v1395
      %1423 = vmatprep.subr.mxu0 0.0
      %1424 = vmatpush1.msra.mxu0 %v1396
      %1425 = vmatprep.subr.mxu0 0.0
      %1426 = vmatpush1.msra.mxu0 %v1397
      %1427 = vmatprep.subr.mxu0 0.0
      %1428 = vmatpush1.msra.mxu0 %v1398
      %1429 = vmatprep.subr.mxu0 0.0
      %1430 = vmatpush1.msra.mxu0 %v1399
      %1431 = vmatprep.subr.mxu0 0.0
      %1432 = vmatpush1.msra.mxu0 %v1400
      %1433 = vmatprep.subr.mxu0 0.0
      %1434 = vmatpush1.msra.mxu0 %v1401
      %1435 = vmatprep.subr.mxu0 0.0
      %1436 = vmatpush1.msra.mxu0 %v1402
      %1437 = vmatprep.subr.mxu0 0.0
      %1438 = vmatpush1.msra.mxu0 %v1403
      %1439 = vmatprep.subr.mxu0 0.0
      %1440 = vmatpush1.msra.mxu0 %v1404
      %1441 = vmatprep.subr.mxu0 0.0
      %1442 = vmatpush1.msra.mxu0 %v1405
      %1443 = vmatprep.subr.mxu0 0.0
      %1444 = vmatpush1.msra.mxu0 %v1406
      %1445 = vmatprep.subr.mxu0 0.0
      %1446 = vmatpush1.msra.mxu0 %v1407
      %1447 = vmatprep.subr.mxu0 0.0
      %1448 = vmatpush1.msra.mxu0 0.0
      %1449 = vmatprep.subr.mxu0 0.0
      %1450 = vmatpush1.msra.mxu0 0.0
      %1451 = vmatprep.subr.mxu0 0.0
      %1452 = vmatpush1.msra.mxu0 0.0
      %1453 = vmatprep.subr.mxu0 0.0
      %1454 = vmatpush1.msra.mxu0 0.0
      %1455 = vmatprep.subr.mxu0 0.0
      %1456 = vmatpush1.msra.mxu0 0.0
      %1457 = vmatprep.subr.mxu0 0.0
      %1458 = vmatpush1.msra.mxu0 0.0
      %1459 = vmatprep.subr.mxu0 0.0
      %1460 = vmatpush1.msra.mxu0 0.0
      %1461 = vmatprep.subr.mxu0 0.0
      %1462 = vmatpush1.msra.mxu0 0.0
      %1463 = vmatprep.subr.mxu0 0.0
      %1464 = vmatpush1.msra.mxu0 0.0
      %1465 = vmatprep.subr.mxu0 0.0
      %1466 = vmatpush1.msra.mxu0 0.0
      %1467 = vmatprep.subr.mxu0 0.0
      %1468 = vmatpush1.msra.mxu0 0.0
      %1469 = vmatprep.subr.mxu0 0.0
      %1470 = vmatpush1.msra.mxu0 0.0
      %1471 = vmatprep.subr.mxu0 0.0
      %1472 = vmatpush1.msra.mxu0 0.0
      %1473 = vmatprep.subr.mxu0 0.0
      %1474 = vmatpush1.msra.mxu0 0.0
      %1475 = vmatprep.subr.mxu0 0.0
      %1476 = vmatpush1.msra.mxu0 0.0
      %1477 = vmatprep.subr.mxu0 0.0
      %1478 = vmatpush1.msra.mxu0 0.0
      %1479 = vmatprep.mubr.f32.mxu0 0.0
      %1480 = vmatmul.mubr.f32.gmra.mrb[0].mxu0 %v1360
      %v1481 = vpop.f32.mrb[0].mxu0
      %v1482 = vadd.f32 %v1413, %v1481
      %v1483 = vpop.f32.mrb[0].mxu0
      %1484 = vmatprep.mubr.f32.mxu0 0.0
      %1485 = vmatmul.mubr.f32.gmra.mrb[0].mxu0 %v1361
      %v1486 = vpop.f32.mrb[0].mxu0
      %v1487 = vadd.f32 %v1413, %v1486
      %v1488 = vpop.f32.mrb[0].mxu0
      %1489 = vmatprep.mubr.f32.mxu0 0.0
      %1490 = vmatmul.mubr.f32.gmra.mrb[0].mxu0 %v1362
      %v1491 = vpop.f32.mrb[0].mxu0
      %v1492 = vadd.f32 %v1413, %v1491
      %v1493 = vpop.f32.mrb[0].mxu0
      %1494 = vmatprep.mubr.f32.mxu0 0.0
      %1495 = vmatmul.mubr.f32.gmra.mrb[0].mxu0 %v1363
      %v1496 = vpop.f32.mrb[0].mxu0
      %v1497 = vadd.f32 %v1413, %v1496
      %v1498 = vpop.f32.mrb[0].mxu0
      %1499 = vmatprep.mubr.f32.mxu0 0.0
      %1500 = vmatmul.mubr.f32.gmra.mrb[0].mxu0 %v1364
      %v1501 = vpop.f32.mrb[0].mxu0
      %v1502 = vadd.f32 %v1413, %v1501
      %v1503 = vpop.f32.mrb[0].mxu0
      %1504 = vmatprep.mubr.f32.mxu0 0.0
      %1505 = vmatmul.mubr.f32.gmra.mrb[0].mxu0 %v1365
      %v1506 = vpop.f32.mrb[0].mxu0
      %v1507 = vadd.f32 %v1413, %v1506
      %v1508 = vpop.f32.mrb[0].mxu0
      %1509 = vmatprep.mubr.f32.mxu0 0.0
      %1510 = vmatmul.mubr.f32.gmra.mrb[0].mxu0 %v1366
      %v1511 = vpop.f32.mrb[0].mxu0
      %v1512 = vadd.f32 %v1413, %v1511
      %v1513 = vpop.f32.mrb[0].mxu0
      %1514 = vmatprep.mubr.f32.mxu0 0.0
      %1515 = vmatmul.mubr.f32.gmra.mrb[0].mxu0 %v1367
      %v1516 = vpop.f32.mrb[0].mxu0
      %v1517 = vadd.f32 %v1413, %v1516
      %v1518 = vpop.f32.mrb[0].mxu0
      %1519 = vmatprep.mubr.f32.mxu0 0.0
      %1520 = vmatmul.mubr.f32.gmra.mrb[0].mxu0 %v1368
      %v1521 = vpop.f32.mrb[0].mxu0
      %v1522 = vadd.f32 %v1413, %v1521
      %v1523 = vpop.f32.mrb[0].mxu0
      %1524 = vmatprep.mubr.f32.mxu0 0.0
      %1525 = vmatmul.mubr.f32.gmra.mrb[0].mxu0 %v1369
      %v1526 = vpop.f32.mrb[0].mxu0
      %v1527 = vadd.f32 %v1413, %v1526
      %v1528 = vpop.f32.mrb[0].mxu0
      %1529 = vmatprep.mubr.f32.mxu0 0.0
      %1530 = vmatmul.mubr.f32.gmra.mrb[0].mxu0 %v1370
      %v1531 = vpop.f32.mrb[0].mxu0
      %v1532 = vadd.f32 %v1413, %v1531
      %v1533 = vpop.f32.mrb[0].mxu0
      %1534 = vmatprep.mubr.f32.mxu0 0.0
      %1535 = vmatmul.mubr.f32.gmra.mrb[0].mxu0 %v1371
      %v1536 = vpop.f32.mrb[0].mxu0
      %v1537 = vadd.f32 %v1413, %v1536
      %v1538 = vpop.f32.mrb[0].mxu0
      %1539 = vmatprep.mubr.f32.mxu0 0.0
      %1540 = vmatmul.mubr.f32.gmra.mrb[0].mxu0 %v1372
      %v1541 = vpop.f32.mrb[0].mxu0
      %v1542 = vadd.f32 %v1413, %v1541
      %v1543 = vpop.f32.mrb[0].mxu0
      %1544 = vmatprep.mubr.f32.mxu0 0.0
      %1545 = vmatmul.mubr.f32.gmra.mrb[0].mxu0 %v1373
      %v1546 = vpop.f32.mrb[0].mxu0
      %v1547 = vadd.f32 %v1413, %v1546
      %v1548 = vpop.f32.mrb[0].mxu0
      %1549 = vmatprep.mubr.f32.mxu0 0.0
      %1550 = vmatmul.mubr.f32.gmra.mrb[0].mxu0 %v1374
      %v1551 = vpop.f32.mrb[0].mxu0
      %v1552 = vadd.f32 %v1413, %v1551
      %v1553 = vpop.f32.mrb[0].mxu0
      %1554 = vmatprep.mubr.f32.mxu0 0.0
      %1555 = vmatmul.mubr.f32.gmra.mrb[0].mxu0 %v1375
      %v1556 = vpop.f32.mrb[0].mxu0
      %v1557 = vadd.f32 %v1413, %v1556
      %v1558 = vpop.f32.mrb[0].mxu0
      %1559 = vmatprep.mubr.f32.mxu0 0.0
      %1560 = vmatmul.mubr.f32.gmra.mrb[0].mxu0 %v1376
      %v1561 = vpop.f32.mrb[0].mxu0
      %v1562 = vadd.f32 %v1413, %v1561
      %v1563 = vpop.f32.mrb[0].mxu0
      %1564 = vmatprep.mubr.f32.mxu0 0.0
      %1565 = vmatmul.mubr.f32.gmra.mrb[0].mxu0 %v1377
      %v1566 = vpop.f32.mrb[0].mxu0
      %v1567 = vadd.f32 %v1413, %v1566
      %v1568 = vpop.f32.mrb[0].mxu0
      %1569 = vmatprep.mubr.f32.mxu0 0.0
      %1570 = vmatmul.mubr.f32.gmra.mrb[0].mxu0 %v1378
      %v1571 = vpop.f32.mrb[0].mxu0
      %v1572 = vadd.f32 %v1413, %v1571
      %v1573 = vpop.f32.mrb[0].mxu0
      %1574 = vmatprep.mubr.f32.mxu0 0.0
      %1575 = vmatmul.mubr.f32.gmra.mrb[0].mxu0 %v1379
      %v1576 = vpop.f32.mrb[0].mxu0
      %v1577 = vadd.f32 %v1413, %v1576
      %v1578 = vpop.f32.mrb[0].mxu0
      %1579 = vmatprep.mubr.f32.mxu0 0.0
      %1580 = vmatmul.mubr.f32.gmra.mrb[0].mxu0 %v1380
      %v1581 = vpop.f32.mrb[0].mxu0
      %v1582 = vadd.f32 %v1413, %v1581
      %v1583 = vpop.f32.mrb[0].mxu0
      %1584 = vmatprep.mubr.f32.mxu0 0.0
      %1585 = vmatmul.mubr.f32.gmra.mrb[0].mxu0 %v1381
      %v1586 = vpop.f32.mrb[0].mxu0
      %v1587 = vadd.f32 %v1413, %v1586
      %v1588 = vpop.f32.mrb[0].mxu0
      %1589 = vmatprep.mubr.f32.mxu0 0.0
      %1590 = vmatmul.mubr.f32.gmra.mrb[0].mxu0 %v1382
      %v1591 = vpop.f32.mrb[0].mxu0
      %v1592 = vadd.f32 %v1413, %v1591
      %v1593 = vpop.f32.mrb[0].mxu0
      %1594 = vmatprep.mubr.f32.mxu0 0.0
      %1595 = vmatmul.mubr.f32.gmra.mrb[0].mxu0 %v1383
      %v1596 = vpop.f32.mrb[0].mxu0
      %v1597 = vadd.f32 %v1413, %v1596
      %v1598 = vpop.f32.mrb[0].mxu0
      %1599 = vmatprep.mubr.f32.mxu0 0.0
      %1600 = vmatmul.mubr.f32.gmra.mrb[0].mxu0 %v1384
      %v1601 = vpop.f32.mrb[0].mxu0
      %v1602 = vadd.f32 %v1413, %v1601
      %v1603 = vpop.f32.mrb[0].mxu0
      %1604 = vmatprep.mubr.f32.mxu0 0.0
      %1605 = vmatmul.mubr.f32.gmra.mrb[0].mxu0 %v1385
      %v1606 = vpop.f32.mrb[0].mxu0
      %v1607 = vadd.f32 %v1413, %v1606
      %v1608 = vpop.f32.mrb[0].mxu0
      %1609 = vmatprep.mubr.f32.mxu0 0.0
      %1610 = vmatmul.mubr.f32.gmra.mrb[0].mxu0 %v1386
      %v1611 = vpop.f32.mrb[0].mxu0
      %v1612 = vadd.f32 %v1413, %v1611
      %v1613 = vpop.f32.mrb[0].mxu0
      %1614 = vmatprep.mubr.f32.mxu0 0.0
      %1615 = vmatmul.mubr.f32.gmra.mrb[0].mxu0 %v1387
      %v1616 = vpop.f32.mrb[0].mxu0
      %v1617 = vadd.f32 %v1413, %v1616
      %v1618 = vpop.f32.mrb[0].mxu0
      %1619 = vmatprep.mubr.f32.mxu0 0.0
      %1620 = vmatmul.mubr.f32.gmra.mrb[0].mxu0 %v1388
      %v1621 = vpop.f32.mrb[0].mxu0
      %v1622 = vadd.f32 %v1413, %v1621
      %v1623 = vpop.f32.mrb[0].mxu0
      %1624 = vmatprep.mubr.f32.mxu0 0.0
      %1625 = vmatmul.mubr.f32.gmra.mrb[0].mxu0 %v1389
      %v1626 = vpop.f32.mrb[0].mxu0
      %v1627 = vadd.f32 %v1413, %v1626
      %v1628 = vpop.f32.mrb[0].mxu0
      %1629 = vmatprep.mubr.f32.mxu0 0.0
      %1630 = vmatmul.mubr.f32.gmra.mrb[0].mxu0 %v1390
      %v1631 = vpop.f32.mrb[0].mxu0
      %v1632 = vadd.f32 %v1413, %v1631
      %v1633 = vpop.f32.mrb[0].mxu0
      %1634 = vmatprep.mubr.f32.mxu0 0.0
      %1635 = vmatmul.mubr.f32.gmra.mrb[0].mxu0 %v1391
      %v1636 = vpop.f32.mrb[0].mxu0
      %v1637 = vadd.f32 %v1413, %v1636
      %v1638 = vpop.f32.mrb[0].mxu0
      %1639 = vdwg.mxu0
      %vm1640 = vcmask 23552
      %1641 = vst.msk [vmem:[%s334] sm:$0xff] %vm1640, %v1482
      %1642 = vst.msk [vmem:[%s334 + $0x8] sm:$0xff] %vm1640, %v1487
      %1643 = vst.msk [vmem:[%s334 + $0x10] sm:$0xff] %vm1640, %v1492
      %1644 = vst.msk [vmem:[%s334 + $0x18] sm:$0xff] %vm1640, %v1497
      %1645 = vst.msk [vmem:[%s334 + $0x20] sm:$0xff] %vm1640, %v1502
      %1646 = vst.msk [vmem:[%s334 + $0x28] sm:$0xff] %vm1640, %v1507
      %1647 = vst.msk [vmem:[%s334 + $0x30] sm:$0xff] %vm1640, %v1512
      %1648 = vst.msk [vmem:[%s334 + $0x38] sm:$0xff] %vm1640, %v1517
      %1649 = vst.msk [vmem:[%s334 + $0x40] sm:$0xff] %vm1640, %v1522
      %1650 = vst.msk [vmem:[%s334 + $0x48] sm:$0xff] %vm1640, %v1527
      %1651 = vst.msk [vmem:[%s334 + $0x50] sm:$0xff] %vm1640, %v1532
      %1652 = vst.msk [vmem:[%s334 + $0x58] sm:$0xff] %vm1640, %v1537
      %1653 = vst.msk [vmem:[%s334 + $0x60] sm:$0xff] %vm1640, %v1542
      %1654 = vst.msk [vmem:[%s334 + $0x68] sm:$0xff] %vm1640, %v1547
      %1655 = vst.msk [vmem:[%s334 + $0x70] sm:$0xff] %vm1640, %v1552
      %1656 = vst.msk [vmem:[%s334 + $0x78] sm:$0xff] %vm1640, %v1557
      %1657 = vst.msk [vmem:[%s334 + $0x80] sm:$0xff] %vm1640, %v1562
      %1658 = vst.msk [vmem:[%s334 + $0x88] sm:$0xff] %vm1640, %v1567
      %1659 = vst.msk [vmem:[%s334 + $0x90] sm:$0xff] %vm1640, %v1572
      %1660 = vst.msk [vmem:[%s334 + $0x98] sm:$0xff] %vm1640, %v1577
      %1661 = vst.msk [vmem:[%s334 + $0xa0] sm:$0xff] %vm1640, %v1582
      %1662 = vst.msk [vmem:[%s334 + $0xa8] sm:$0xff] %vm1640, %v1587
      %1663 = vst.msk [vmem:[%s334 + $0xb0] sm:$0xff] %vm1640, %v1592
      %1664 = vst.msk [vmem:[%s334 + $0xb8] sm:$0xff] %vm1640, %v1597
      %1665 = vst.msk [vmem:[%s334 + $0xc0] sm:$0xff] %vm1640, %v1602
      %1666 = vst.msk [vmem:[%s334 + $0xc8] sm:$0xff] %vm1640, %v1607
      %1667 = vst.msk [vmem:[%s334 + $0xd0] sm:$0xff] %vm1640, %v1612
      %1668 = vst.msk [vmem:[%s334 + $0xd8] sm:$0xff] %vm1640, %v1617
      %1669 = vst.msk [vmem:[%s334 + $0xe0] sm:$0xff] %vm1640, %v1622
      %1670 = vst.msk [vmem:[%s334 + $0xe8] sm:$0xff] %vm1640, %v1627
      %1671 = vst.msk [vmem:[%s334 + $0xf0] sm:$0xff] %vm1640, %v1632
      %1672 = vst.msk [vmem:[%s334 + $0xf8] sm:$0xff] %vm1640, %v1637
      %s1673 = smul.u32 32, %s20
      %p1674 = scmp.lt.s32.totalorder %s1673, 127
      %s1675 = scalar_select %p1674, %s1673, 127
      %s1676 = smul.addr %s1675, 8
      %s1677 = scalar_lea.vmem %s9, %s1676
      // Predicated region
      $region57: #{tpu_custom_call.1} parent=55 // pred_check
        %p1678 = pneg %p232
      $region58: #{tpu_custom_call.1} parent=55 // pred_check_branch
        %1680 = sbr.rel (%p1678) target = $region60
      $region59: #{tpu_custom_call.1} parent=55 // pred_region
        %s1681 = smul.u32 32, %s20
      $region60: #{tpu_custom_call.1} parent=55 // pred_fallthru
        _
    $region56: #{tpu_custom_call.1} parent=5 // pred_fallthru
      _
    %p1682 = scmp.le.s32.totalorder 2, %s15
    // Predicated region
    $region61: #{tpu_custom_call.1} parent=5 // pred_check
      %p1683 = pneg %p1682
    $region62: #{tpu_custom_call.1} parent=5 // pred_check_branch
      %1685 = sbr.rel (%p1683) target = $region64
    $region63: #{tpu_custom_call.1} parent=5 // pred_region
      %s1686 = ssub.s32 %s15, 2
      // Predicated region
      $region65: #{tpu_custom_call.1} parent=63 // pred_check
        %p1687 = pneg %p238
      $region66: #{tpu_custom_call.1} parent=63 // pred_check_branch
        %1689 = sbr.rel (%p1687) target = $region68
      $region67: #{tpu_custom_call.1} parent=63 // pred_region
        %s1690 = smul.u32 32, %s21
        %p1691 = scmp.lt.s32.totalorder %s1690, 127
        %s1692 = scalar_select %p1691, %s1690, 127
        %s1693 = smul.addr %s1692, 8
        %s1694 = scalar_lea.vmem %s9, %s1693
      $region68: #{tpu_custom_call.1} parent=63 // pred_fallthru
        _
    $region64: #{tpu_custom_call.1} parent=5 // pred_fallthru
      _
  $region6: #{tpu_custom_call.1} parent=0 // loop_footer
    %s19 = sadd.s32 1, %s15
  $region7: #{tpu_custom_call.1} parent=0 // loop_footer_branch
    %14 = sbr.rel target = $region3
  $region8: #{tpu_custom_call.1} parent=0 // loop_exit
    _

</llo_original>
